<compile_context>
chip_gen: v7x
topology: tpu7x:2x2x1
jax: 0.10.0
libtpu: 0.0.40
codegen_flags: <defaults>
</compile_context>

<pallas_src>
import jax
import jax.numpy as jnp
from jax.experimental import pallas as pl
from jax.experimental.pallas import tpu as pltpu

HIDDEN_DIM = 32
INPUT_DIM = 1
NUM_LAYERS = 2   # hard-wired as two explicit cells in the kernel
OUTPUT_DIM = 1


def _lstm_recurrence_kernel(xproj_ref, whh0_ref, w1_ref, b1_ref, h1_out_ref):
    """Runs the full 2-layer LSTM recurrence over T timesteps.

    xproj_ref : (T, B, 4H)  precomputed x @ W_ih0^T + b0 per timestep
    whh0_ref  : (H, 4H)     layer-0 recurrent weights (pre-transposed)
    w1_ref    : (2H, 4H)    fused layer-1 weights [W_ih_l1^T ; W_hh_l1^T]
    b1_ref    : (1, 4H)     combined layer-1 bias
    h1_out_ref: (B, H)      last-timestep top-layer hidden state
    """
    T, B, G = xproj_ref.shape           # G == 4*H
    H = HIDDEN_DIM

    # ---- loop invariants: load / broadcast once, outside the time loop ----
    whh0 = whh0_ref[...]                              # (H, 4H)
    w1 = w1_ref[...]                                  # (2H, 4H)
    b1 = jnp.broadcast_to(b1_ref[...], (B, G))        # (B, 4H)
    lane = jax.lax.broadcasted_iota(jnp.int32, (B, G), 1)
    g_mask = (lane >= 2 * H) & (lane < 3 * H)         # g-gate lanes

    def activate(gates):
        # Whole-vreg sigmoid + tanh (EUP slot), blend g-gate lanes, then slice.
        act = jnp.where(g_mask, jnp.tanh(gates), jax.nn.sigmoid(gates))
        i_g = act[:, 0:H]
        f_g = act[:, H:2 * H]
        g_g = act[:, 2 * H:3 * H]
        o_g = act[:, 3 * H:4 * H]
        return i_g, f_g, g_g, o_g

    def step(t, carry):
        h0, c0, h1, c1 = carry

        # layer 0: input projection precomputed; only the recurrent matmul.
        gates0 = xproj_ref[t] + jnp.dot(h0, whh0,
                                        preferred_element_type=jnp.float32)
        i0, f0, g0, o0 = activate(gates0)
        c0 = f0 * c0 + i0 * g0
        h0 = o0 * jnp.tanh(c0)

        # layer 1: fused i2h + h2h matmul on concat([h0_new, h1_prev]).
        gates1 = jnp.dot(jnp.concatenate([h0, h1], axis=-1), w1,
                         preferred_element_type=jnp.float32) + b1
        i1, f1, g1, o1 = activate(gates1)
        c1 = f1 * c1 + i1 * g1
        h1 = o1 * jnp.tanh(c1)

        return h0, c0, h1, c1

    zeros = jnp.zeros((B, H), jnp.float32)
    _, _, h1_last, _ = jax.lax.fori_loop(
        0, T, step, (zeros, zeros, zeros, zeros), unroll=True)

    h1_out_ref[...] = h1_last


def init_params(key):
    """Deterministic init matching nn.LSTM / nn.Linear parameter shapes."""
    H, D, O = HIDDEN_DIM, INPUT_DIM, OUTPUT_DIM
    k = 1.0 / jnp.sqrt(jnp.float32(H))
    keys = jax.random.split(key, 11)
    u = lambda kk, shape: jax.random.uniform(kk, shape, jnp.float32, -k, k)
    params = {
        # layer 0
        "w_ih_l0": u(keys[0], (4 * H, D)),
        "w_hh_l0": u(keys[1], (4 * H, H)),
        "b_ih_l0": u(keys[2], (4 * H,)),
        "b_hh_l0": u(keys[3], (4 * H,)),
        # layer 1
        "w_ih_l1": u(keys[4], (4 * H, H)),
        "w_hh_l1": u(keys[5], (4 * H, H)),
        "b_ih_l1": u(keys[6], (4 * H,)),
        "b_hh_l1": u(keys[7], (4 * H,)),
        # fc
        "w_fc": u(keys[8], (O, H)),
        "b_fc": u(keys[9], (O,)),
    }
    return params


@jax.jit
def lstm_forward(x, params):
    """x: (B, T, INPUT_DIM) float32 (PyTorch batch_first). Returns (B, OUTPUT_DIM)."""
    B, T, D = x.shape
    H = HIDDEN_DIM
    G = 4 * H

    x = x.astype(jnp.float32)

    # Hoisted layer-0 input projection (no serial dependence): one batched
    # matmul over all T timesteps, bias folded in.
    wih0 = params["w_ih_l0"].T                                     # (D, 4H)
    b0 = (params["b_ih_l0"] + params["b_hh_l0"])[None, None, :]    # (1, 1, 4H)
    xproj = jnp.einsum("btd,dg->btg", x, wih0) + b0                # (B, T, 4H)
    xproj = jnp.transpose(xproj, (1, 0, 2))                        # (T, B, 4H)

    whh0 = params["w_hh_l0"].T                                     # (H, 4H)
    # Fused layer-1 weight: [W_ih_l1^T ; W_hh_l1^T] along K (K = 2H = 64).
    w1 = jnp.concatenate([params["w_ih_l1"].T, params["w_hh_l1"].T], axis=0)
    b1 = (params["b_ih_l1"] + params["b_hh_l1"])[None, :]          # (1, 4H)

    h1_last = pl.pallas_call(
        _lstm_recurrence_kernel,
        out_shape=jax.ShapeDtypeStruct((B, H), jnp.float32),
        grid_spec=pltpu.PrefetchScalarGridSpec(
            num_scalar_prefetch=0,
            grid=(1,),  # whole recurrence in one kernel invocation
            in_specs=[
                pl.BlockSpec((T, B, G), lambda i: (0, 0, 0)),   # xproj
                pl.BlockSpec((H, G), lambda i: (0, 0)),         # whh0
                pl.BlockSpec((2 * H, G), lambda i: (0, 0)),     # fused w1
                pl.BlockSpec((1, G), lambda i: (0, 0)),         # b1
            ],
            out_specs=pl.BlockSpec((B, H), lambda i: (0, 0)),
        ),
        compiler_params=pltpu.CompilerParams(
            dimension_semantics=("arbitrary",),  # recurrence is sequential
        ),
    )(xproj, whh0, w1, b1)

    # Final Linear (hidden_dim -> output_dim) in the wrapper.
    return h1_last @ params["w_fc"].T + params["b_fc"]


def lstm_reference(x, params):
    """Pure-JAX reference (lax.scan) mirroring torch.nn.LSTM semantics."""
    B, T, D = x.shape
    H = HIDDEN_DIM

    def cell(inp, h, c, w_ih, w_hh, b_ih, b_hh):
        gates = inp @ w_ih.T + h @ w_hh.T + b_ih + b_hh
        i, f, g, o = jnp.split(gates, 4, axis=-1)
        i, f, o = jax.nn.sigmoid(i), jax.nn.sigmoid(f), jax.nn.sigmoid(o)
        g = jnp.tanh(g)
        c_new = f * c + i * g
        h_new = o * jnp.tanh(c_new)
        return h_new, c_new

    def step(carry, x_t):
        h0, c0, h1, c1 = carry
        h0, c0 = cell(x_t, h0, c0, params["w_ih_l0"], params["w_hh_l0"],
                      params["b_ih_l0"], params["b_hh_l0"])
        h1, c1 = cell(h0, h1, c1, params["w_ih_l1"], params["w_hh_l1"],
                      params["b_ih_l1"], params["b_hh_l1"])
        return (h0, c0, h1, c1), h1

    zeros = jnp.zeros((B, H), jnp.float32)
    (_, _, h1, _), _ = jax.lax.scan(step, (zeros, zeros, zeros, zeros),
                                    jnp.transpose(x, (1, 0, 2)))
    return h1 @ params["w_fc"].T + params["b_fc"]


if __name__ == "__main__":
    key = jax.random.PRNGKey(0)
    k_param, k_x = jax.random.split(key)

    B, T = 2, 8
    x = jax.random.normal(k_x, (B, T, INPUT_DIM), jnp.float32)
    params = init_params(k_param)

    out = lstm_forward(x, params)
    out = jax.block_until_ready(out)

    ref = lstm_reference(x, params)
    assert out.shape == (B, OUTPUT_DIM)
    assert jnp.allclose(out, ref, atol=1e-5, rtol=1e-5)

    print("KERNEL_OK")
</pallas_src>

<mosaic_0001>
module attributes {stable_mosaic.version = 11 : i64} {
  func.func @_lstm_recurrence_kernel(%arg0: i32, %arg1: memref<8x2x128xf32, #tpu.memory_space<vmem>>, %arg2: memref<32x128xf32, #tpu.memory_space<vmem>>, %arg3: memref<64x128xf32, #tpu.memory_space<vmem>>, %arg4: memref<1x128xf32, #tpu.memory_space<vmem>>, %arg5: memref<2x32xf32, #tpu.memory_space<vmem>>) attributes {dimension_semantics = [#tpu.dimension_semantics<arbitrary>], iteration_bounds = array<i64: 1>, scalar_prefetch = 0 : i64, scratch_operands = 0 : i64, tpu.core_type = #tpu.core_type<tc>, window_params = [{pipeline_mode = #tpu.pipeline_mode<synchronous>, transform_indices = @transform_0, window_bounds = array<i64: 8, 2, 128>}, {pipeline_mode = #tpu.pipeline_mode<synchronous>, transform_indices = @transform_1, window_bounds = array<i64: 32, 128>}, {pipeline_mode = #tpu.pipeline_mode<synchronous>, transform_indices = @transform_2, window_bounds = array<i64: 64, 128>}, {pipeline_mode = #tpu.pipeline_mode<synchronous>, transform_indices = @transform_3, window_bounds = array<i64: 1, 128>}, {pipeline_mode = #tpu.pipeline_mode<synchronous>, transform_indices = @transform_4, window_bounds = array<i64: 2, 32>}]} {
    %c0 = arith.constant 0 : index
    %c0_0 = arith.constant 0 : index
    %0 = vector.load %arg2[%c0, %c0_0] : memref<32x128xf32, #tpu.memory_space<vmem>>, vector<32x128xf32>
    %c0_1 = arith.constant 0 : index
    %c0_2 = arith.constant 0 : index
    %1 = vector.load %arg3[%c0_1, %c0_2] : memref<64x128xf32, #tpu.memory_space<vmem>>, vector<64x128xf32>
    %c0_3 = arith.constant 0 : index
    %c0_4 = arith.constant 0 : index
    %2 = vector.load %arg4[%c0_3, %c0_4] : memref<1x128xf32, #tpu.memory_space<vmem>>, vector<1x128xf32>
    %3 = vector.shape_cast %2 : vector<1x128xf32> to vector<1x128xf32>
    %4 = vector.broadcast %3 : vector<1x128xf32> to vector<2x128xf32>
    %5 = tpu.iota {dimensions = array<i32: 1>} : vector<2x128xi32>
    %c64_i32 = arith.constant 64 : i32
    %6 = vector.broadcast %c64_i32 : i32 to vector<2x128xi32>
    %7 = arith.cmpi sge, %5, %6 : vector<2x128xi32>
    %c96_i32 = arith.constant 96 : i32
    %8 = vector.broadcast %c96_i32 : i32 to vector<2x128xi32>
    %9 = arith.cmpi slt, %5, %8 : vector<2x128xi32>
    %10 = arith.andi %7, %9 : vector<2x128xi1>
    %cst = arith.constant 0.000000e+00 : f32
    %11 = vector.broadcast %cst : f32 to vector<2x32xf32>
    %c0_i32 = arith.constant 0 : i32
    %12 = arith.index_cast %c0_i32 : i32 to index
    %c0_5 = arith.constant 0 : index
    %c0_6 = arith.constant 0 : index
    %13 = vector.load %arg1[%12, %c0_5, %c0_6] : memref<8x2x128xf32, #tpu.memory_space<vmem>>, vector<1x2x128xf32>
    %14 = vector.shape_cast %13 : vector<1x2x128xf32> to vector<2x128xf32>
    %cst_7 = arith.constant dense<0.000000e+00> : vector<2x128xf32>
    %15 = tpu.matmul %11, %0, %cst_7 {dimension_numbers = #tpu.dot_dimension_numbers<[1], [0], [0], [1], [0, 0, 1, 1], [], []>} : vector<2x32xf32>, vector<32x128xf32>, vector<2x128xf32> -> vector<2x128xf32>
    %16 = arith.addf %14, %15 : vector<2x128xf32>
    %17 = math.tanh %16 : vector<2x128xf32>
    %18 = arith.negf %16 : vector<2x128xf32>
    %19 = math.exp %18 : vector<2x128xf32>
    %cst_8 = arith.constant 1.000000e+00 : f32
    %20 = vector.broadcast %cst_8 : f32 to vector<2x128xf32>
    %21 = arith.addf %20, %19 : vector<2x128xf32>
    %22 = arith.divf %20, %21 : vector<2x128xf32>
    %23 = arith.select %10, %17, %22 : vector<2x128xi1>, vector<2x128xf32>
    %24 = vector.extract_strided_slice %23 {offsets = [0, 0], sizes = [2, 32], strides = [1, 1]} : vector<2x128xf32> to vector<2x32xf32>
    %25 = vector.extract_strided_slice %23 {offsets = [0, 32], sizes = [2, 32], strides = [1, 1]} : vector<2x128xf32> to vector<2x32xf32>
    %26 = vector.extract_strided_slice %23 {offsets = [0, 64], sizes = [2, 32], strides = [1, 1]} : vector<2x128xf32> to vector<2x32xf32>
    %27 = vector.extract_strided_slice %23 {offsets = [0, 96], sizes = [2, 32], strides = [1, 1]} : vector<2x128xf32> to vector<2x32xf32>
    %28 = arith.mulf %25, %11 : vector<2x32xf32>
    %29 = arith.mulf %24, %26 : vector<2x32xf32>
    %30 = arith.addf %28, %29 : vector<2x32xf32>
    %31 = math.tanh %30 : vector<2x32xf32>
    %32 = arith.mulf %27, %31 : vector<2x32xf32>
    %33 = tpu.concatenate %32, %11 in 1 : vector<2x32xf32>, vector<2x32xf32> -> vector<2x64xf32>
    %cst_9 = arith.constant dense<0.000000e+00> : vector<2x128xf32>
    %34 = tpu.matmul %33, %1, %cst_9 {dimension_numbers = #tpu.dot_dimension_numbers<[1], [0], [0], [1], [0, 0, 1, 1], [], []>} : vector<2x64xf32>, vector<64x128xf32>, vector<2x128xf32> -> vector<2x128xf32>
    %35 = arith.addf %34, %4 : vector<2x128xf32>
    %36 = math.tanh %35 : vector<2x128xf32>
    %37 = arith.negf %35 : vector<2x128xf32>
    %38 = math.exp %37 : vector<2x128xf32>
    %cst_10 = arith.constant 1.000000e+00 : f32
    %39 = vector.broadcast %cst_10 : f32 to vector<2x128xf32>
    %40 = arith.addf %39, %38 : vector<2x128xf32>
    %41 = arith.divf %39, %40 : vector<2x128xf32>
    %42 = arith.select %10, %36, %41 : vector<2x128xi1>, vector<2x128xf32>
    %43 = vector.extract_strided_slice %42 {offsets = [0, 0], sizes = [2, 32], strides = [1, 1]} : vector<2x128xf32> to vector<2x32xf32>
    %44 = vector.extract_strided_slice %42 {offsets = [0, 32], sizes = [2, 32], strides = [1, 1]} : vector<2x128xf32> to vector<2x32xf32>
    %45 = vector.extract_strided_slice %42 {offsets = [0, 64], sizes = [2, 32], strides = [1, 1]} : vector<2x128xf32> to vector<2x32xf32>
    %46 = vector.extract_strided_slice %42 {offsets = [0, 96], sizes = [2, 32], strides = [1, 1]} : vector<2x128xf32> to vector<2x32xf32>
    %47 = arith.mulf %44, %11 : vector<2x32xf32>
    %48 = arith.mulf %43, %45 : vector<2x32xf32>
    %49 = arith.addf %47, %48 : vector<2x32xf32>
    %50 = math.tanh %49 : vector<2x32xf32>
    %51 = arith.mulf %46, %50 : vector<2x32xf32>
    %c1_i32 = arith.constant 1 : i32
    %52 = arith.index_cast %c1_i32 : i32 to index
    %c0_11 = arith.constant 0 : index
    %c0_12 = arith.constant 0 : index
    %53 = vector.load %arg1[%52, %c0_11, %c0_12] : memref<8x2x128xf32, #tpu.memory_space<vmem>>, vector<1x2x128xf32>
    %54 = vector.shape_cast %53 : vector<1x2x128xf32> to vector<2x128xf32>
    %cst_13 = arith.constant dense<0.000000e+00> : vector<2x128xf32>
    %55 = tpu.matmul %32, %0, %cst_13 {dimension_numbers = #tpu.dot_dimension_numbers<[1], [0], [0], [1], [0, 0, 1, 1], [], []>} : vector<2x32xf32>, vector<32x128xf32>, vector<2x128xf32> -> vector<2x128xf32>
    %56 = arith.addf %54, %55 : vector<2x128xf32>
    %57 = math.tanh %56 : vector<2x128xf32>
    %58 = arith.negf %56 : vector<2x128xf32>
    %59 = math.exp %58 : vector<2x128xf32>
    %cst_14 = arith.constant 1.000000e+00 : f32
    %60 = vector.broadcast %cst_14 : f32 to vector<2x128xf32>
    %61 = arith.addf %60, %59 : vector<2x128xf32>
    %62 = arith.divf %60, %61 : vector<2x128xf32>
    %63 = arith.select %10, %57, %62 : vector<2x128xi1>, vector<2x128xf32>
    %64 = vector.extract_strided_slice %63 {offsets = [0, 0], sizes = [2, 32], strides = [1, 1]} : vector<2x128xf32> to vector<2x32xf32>
    %65 = vector.extract_strided_slice %63 {offsets = [0, 32], sizes = [2, 32], strides = [1, 1]} : vector<2x128xf32> to vector<2x32xf32>
    %66 = vector.extract_strided_slice %63 {offsets = [0, 64], sizes = [2, 32], strides = [1, 1]} : vector<2x128xf32> to vector<2x32xf32>
    %67 = vector.extract_strided_slice %63 {offsets = [0, 96], sizes = [2, 32], strides = [1, 1]} : vector<2x128xf32> to vector<2x32xf32>
    %68 = arith.mulf %65, %30 : vector<2x32xf32>
    %69 = arith.mulf %64, %66 : vector<2x32xf32>
    %70 = arith.addf %68, %69 : vector<2x32xf32>
    %71 = math.tanh %70 : vector<2x32xf32>
    %72 = arith.mulf %67, %71 : vector<2x32xf32>
    %73 = tpu.concatenate %72, %51 in 1 : vector<2x32xf32>, vector<2x32xf32> -> vector<2x64xf32>
    %cst_15 = arith.constant dense<0.000000e+00> : vector<2x128xf32>
    %74 = tpu.matmul %73, %1, %cst_15 {dimension_numbers = #tpu.dot_dimension_numbers<[1], [0], [0], [1], [0, 0, 1, 1], [], []>} : vector<2x64xf32>, vector<64x128xf32>, vector<2x128xf32> -> vector<2x128xf32>
    %75 = arith.addf %74, %4 : vector<2x128xf32>
    %76 = math.tanh %75 : vector<2x128xf32>
    %77 = arith.negf %75 : vector<2x128xf32>
    %78 = math.exp %77 : vector<2x128xf32>
    %cst_16 = arith.constant 1.000000e+00 : f32
    %79 = vector.broadcast %cst_16 : f32 to vector<2x128xf32>
    %80 = arith.addf %79, %78 : vector<2x128xf32>
    %81 = arith.divf %79, %80 : vector<2x128xf32>
    %82 = arith.select %10, %76, %81 : vector<2x128xi1>, vector<2x128xf32>
    %83 = vector.extract_strided_slice %82 {offsets = [0, 0], sizes = [2, 32], strides = [1, 1]} : vector<2x128xf32> to vector<2x32xf32>
    %84 = vector.extract_strided_slice %82 {offsets = [0, 32], sizes = [2, 32], strides = [1, 1]} : vector<2x128xf32> to vector<2x32xf32>
    %85 = vector.extract_strided_slice %82 {offsets = [0, 64], sizes = [2, 32], strides = [1, 1]} : vector<2x128xf32> to vector<2x32xf32>
    %86 = vector.extract_strided_slice %82 {offsets = [0, 96], sizes = [2, 32], strides = [1, 1]} : vector<2x128xf32> to vector<2x32xf32>
    %87 = arith.mulf %84, %49 : vector<2x32xf32>
    %88 = arith.mulf %83, %85 : vector<2x32xf32>
    %89 = arith.addf %87, %88 : vector<2x32xf32>
    %90 = math.tanh %89 : vector<2x32xf32>
    %91 = arith.mulf %86, %90 : vector<2x32xf32>
    %c2_i32 = arith.constant 2 : i32
    %92 = arith.index_cast %c2_i32 : i32 to index
    %c0_17 = arith.constant 0 : index
    %c0_18 = arith.constant 0 : index
    %93 = vector.load %arg1[%92, %c0_17, %c0_18] : memref<8x2x128xf32, #tpu.memory_space<vmem>>, vector<1x2x128xf32>
    %94 = vector.shape_cast %93 : vector<1x2x128xf32> to vector<2x128xf32>
    %cst_19 = arith.constant dense<0.000000e+00> : vector<2x128xf32>
    %95 = tpu.matmul %72, %0, %cst_19 {dimension_numbers = #tpu.dot_dimension_numbers<[1], [0], [0], [1], [0, 0, 1, 1], [], []>} : vector<2x32xf32>, vector<32x128xf32>, vector<2x128xf32> -> vector<2x128xf32>
    %96 = arith.addf %94, %95 : vector<2x128xf32>
    %97 = math.tanh %96 : vector<2x128xf32>
    %98 = arith.negf %96 : vector<2x128xf32>
    %99 = math.exp %98 : vector<2x128xf32>
    %cst_20 = arith.constant 1.000000e+00 : f32
    %100 = vector.broadcast %cst_20 : f32 to vector<2x128xf32>
    %101 = arith.addf %100, %99 : vector<2x128xf32>
    %102 = arith.divf %100, %101 : vector<2x128xf32>
    %103 = arith.select %10, %97, %102 : vector<2x128xi1>, vector<2x128xf32>
    %104 = vector.extract_strided_slice %103 {offsets = [0, 0], sizes = [2, 32], strides = [1, 1]} : vector<2x128xf32> to vector<2x32xf32>
    %105 = vector.extract_strided_slice %103 {offsets = [0, 32], sizes = [2, 32], strides = [1, 1]} : vector<2x128xf32> to vector<2x32xf32>
    %106 = vector.extract_strided_slice %103 {offsets = [0, 64], sizes = [2, 32], strides = [1, 1]} : vector<2x128xf32> to vector<2x32xf32>
    %107 = vector.extract_strided_slice %103 {offsets = [0, 96], sizes = [2, 32], strides = [1, 1]} : vector<2x128xf32> to vector<2x32xf32>
    %108 = arith.mulf %105, %70 : vector<2x32xf32>
    %109 = arith.mulf %104, %106 : vector<2x32xf32>
    %110 = arith.addf %108, %109 : vector<2x32xf32>
    %111 = math.tanh %110 : vector<2x32xf32>
    %112 = arith.mulf %107, %111 : vector<2x32xf32>
    %113 = tpu.concatenate %112, %91 in 1 : vector<2x32xf32>, vector<2x32xf32> -> vector<2x64xf32>
    %cst_21 = arith.constant dense<0.000000e+00> : vector<2x128xf32>
    %114 = tpu.matmul %113, %1, %cst_21 {dimension_numbers = #tpu.dot_dimension_numbers<[1], [0], [0], [1], [0, 0, 1, 1], [], []>} : vector<2x64xf32>, vector<64x128xf32>, vector<2x128xf32> -> vector<2x128xf32>
    %115 = arith.addf %114, %4 : vector<2x128xf32>
    %116 = math.tanh %115 : vector<2x128xf32>
    %117 = arith.negf %115 : vector<2x128xf32>
    %118 = math.exp %117 : vector<2x128xf32>
    %cst_22 = arith.constant 1.000000e+00 : f32
    %119 = vector.broadcast %cst_22 : f32 to vector<2x128xf32>
    %120 = arith.addf %119, %118 : vector<2x128xf32>
    %121 = arith.divf %119, %120 : vector<2x128xf32>
    %122 = arith.select %10, %116, %121 : vector<2x128xi1>, vector<2x128xf32>
    %123 = vector.extract_strided_slice %122 {offsets = [0, 0], sizes = [2, 32], strides = [1, 1]} : vector<2x128xf32> to vector<2x32xf32>
    %124 = vector.extract_strided_slice %122 {offsets = [0, 32], sizes = [2, 32], strides = [1, 1]} : vector<2x128xf32> to vector<2x32xf32>
    %125 = vector.extract_strided_slice %122 {offsets = [0, 64], sizes = [2, 32], strides = [1, 1]} : vector<2x128xf32> to vector<2x32xf32>
    %126 = vector.extract_strided_slice %122 {offsets = [0, 96], sizes = [2, 32], strides = [1, 1]} : vector<2x128xf32> to vector<2x32xf32>
    %127 = arith.mulf %124, %89 : vector<2x32xf32>
    %128 = arith.mulf %123, %125 : vector<2x32xf32>
    %129 = arith.addf %127, %128 : vector<2x32xf32>
    %130 = math.tanh %129 : vector<2x32xf32>
    %131 = arith.mulf %126, %130 : vector<2x32xf32>
    %c3_i32 = arith.constant 3 : i32
    %132 = arith.index_cast %c3_i32 : i32 to index
    %c0_23 = arith.constant 0 : index
    %c0_24 = arith.constant 0 : index
    %133 = vector.load %arg1[%132, %c0_23, %c0_24] : memref<8x2x128xf32, #tpu.memory_space<vmem>>, vector<1x2x128xf32>
    %134 = vector.shape_cast %133 : vector<1x2x128xf32> to vector<2x128xf32>
    %cst_25 = arith.constant dense<0.000000e+00> : vector<2x128xf32>
    %135 = tpu.matmul %112, %0, %cst_25 {dimension_numbers = #tpu.dot_dimension_numbers<[1], [0], [0], [1], [0, 0, 1, 1], [], []>} : vector<2x32xf32>, vector<32x128xf32>, vector<2x128xf32> -> vector<2x128xf32>
    %136 = arith.addf %134, %135 : vector<2x128xf32>
    %137 = math.tanh %136 : vector<2x128xf32>
    %138 = arith.negf %136 : vector<2x128xf32>
    %139 = math.exp %138 : vector<2x128xf32>
    %cst_26 = arith.constant 1.000000e+00 : f32
    %140 = vector.broadcast %cst_26 : f32 to vector<2x128xf32>
    %141 = arith.addf %140, %139 : vector<2x128xf32>
    %142 = arith.divf %140, %141 : vector<2x128xf32>
    %143 = arith.select %10, %137, %142 : vector<2x128xi1>, vector<2x128xf32>
    %144 = vector.extract_strided_slice %143 {offsets = [0, 0], sizes = [2, 32], strides = [1, 1]} : vector<2x128xf32> to vector<2x32xf32>
    %145 = vector.extract_strided_slice %143 {offsets = [0, 32], sizes = [2, 32], strides = [1, 1]} : vector<2x128xf32> to vector<2x32xf32>
    %146 = vector.extract_strided_slice %143 {offsets = [0, 64], sizes = [2, 32], strides = [1, 1]} : vector<2x128xf32> to vector<2x32xf32>
    %147 = vector.extract_strided_slice %143 {offsets = [0, 96], sizes = [2, 32], strides = [1, 1]} : vector<2x128xf32> to vector<2x32xf32>
    %148 = arith.mulf %145, %110 : vector<2x32xf32>
    %149 = arith.mulf %144, %146 : vector<2x32xf32>
    %150 = arith.addf %148, %149 : vector<2x32xf32>
    %151 = math.tanh %150 : vector<2x32xf32>
    %152 = arith.mulf %147, %151 : vector<2x32xf32>
    %153 = tpu.concatenate %152, %131 in 1 : vector<2x32xf32>, vector<2x32xf32> -> vector<2x64xf32>
    %cst_27 = arith.constant dense<0.000000e+00> : vector<2x128xf32>
    %154 = tpu.matmul %153, %1, %cst_27 {dimension_numbers = #tpu.dot_dimension_numbers<[1], [0], [0], [1], [0, 0, 1, 1], [], []>} : vector<2x64xf32>, vector<64x128xf32>, vector<2x128xf32> -> vector<2x128xf32>
    %155 = arith.addf %154, %4 : vector<2x128xf32>
    %156 = math.tanh %155 : vector<2x128xf32>
    %157 = arith.negf %155 : vector<2x128xf32>
    %158 = math.exp %157 : vector<2x128xf32>
    %cst_28 = arith.constant 1.000000e+00 : f32
    %159 = vector.broadcast %cst_28 : f32 to vector<2x128xf32>
    %160 = arith.addf %159, %158 : vector<2x128xf32>
    %161 = arith.divf %159, %160 : vector<2x128xf32>
    %162 = arith.select %10, %156, %161 : vector<2x128xi1>, vector<2x128xf32>
    %163 = vector.extract_strided_slice %162 {offsets = [0, 0], sizes = [2, 32], strides = [1, 1]} : vector<2x128xf32> to vector<2x32xf32>
    %164 = vector.extract_strided_slice %162 {offsets = [0, 32], sizes = [2, 32], strides = [1, 1]} : vector<2x128xf32> to vector<2x32xf32>
    %165 = vector.extract_strided_slice %162 {offsets = [0, 64], sizes = [2, 32], strides = [1, 1]} : vector<2x128xf32> to vector<2x32xf32>
    %166 = vector.extract_strided_slice %162 {offsets = [0, 96], sizes = [2, 32], strides = [1, 1]} : vector<2x128xf32> to vector<2x32xf32>
    %167 = arith.mulf %164, %129 : vector<2x32xf32>
    %168 = arith.mulf %163, %165 : vector<2x32xf32>
    %169 = arith.addf %167, %168 : vector<2x32xf32>
    %170 = math.tanh %169 : vector<2x32xf32>
    %171 = arith.mulf %166, %170 : vector<2x32xf32>
    %c4_i32 = arith.constant 4 : i32
    %172 = arith.index_cast %c4_i32 : i32 to index
    %c0_29 = arith.constant 0 : index
    %c0_30 = arith.constant 0 : index
    %173 = vector.load %arg1[%172, %c0_29, %c0_30] : memref<8x2x128xf32, #tpu.memory_space<vmem>>, vector<1x2x128xf32>
    %174 = vector.shape_cast %173 : vector<1x2x128xf32> to vector<2x128xf32>
    %cst_31 = arith.constant dense<0.000000e+00> : vector<2x128xf32>
    %175 = tpu.matmul %152, %0, %cst_31 {dimension_numbers = #tpu.dot_dimension_numbers<[1], [0], [0], [1], [0, 0, 1, 1], [], []>} : vector<2x32xf32>, vector<32x128xf32>, vector<2x128xf32> -> vector<2x128xf32>
    %176 = arith.addf %174, %175 : vector<2x128xf32>
    %177 = math.tanh %176 : vector<2x128xf32>
    %178 = arith.negf %176 : vector<2x128xf32>
    %179 = math.exp %178 : vector<2x128xf32>
    %cst_32 = arith.constant 1.000000e+00 : f32
    %180 = vector.broadcast %cst_32 : f32 to vector<2x128xf32>
    %181 = arith.addf %180, %179 : vector<2x128xf32>
    %182 = arith.divf %180, %181 : vector<2x128xf32>
    %183 = arith.select %10, %177, %182 : vector<2x128xi1>, vector<2x128xf32>
    %184 = vector.extract_strided_slice %183 {offsets = [0, 0], sizes = [2, 32], strides = [1, 1]} : vector<2x128xf32> to vector<2x32xf32>
    %185 = vector.extract_strided_slice %183 {offsets = [0, 32], sizes = [2, 32], strides = [1, 1]} : vector<2x128xf32> to vector<2x32xf32>
    %186 = vector.extract_strided_slice %183 {offsets = [0, 64], sizes = [2, 32], strides = [1, 1]} : vector<2x128xf32> to vector<2x32xf32>
    %187 = vector.extract_strided_slice %183 {offsets = [0, 96], sizes = [2, 32], strides = [1, 1]} : vector<2x128xf32> to vector<2x32xf32>
    %188 = arith.mulf %185, %150 : vector<2x32xf32>
    %189 = arith.mulf %184, %186 : vector<2x32xf32>
    %190 = arith.addf %188, %189 : vector<2x32xf32>
    %191 = math.tanh %190 : vector<2x32xf32>
    %192 = arith.mulf %187, %191 : vector<2x32xf32>
    %193 = tpu.concatenate %192, %171 in 1 : vector<2x32xf32>, vector<2x32xf32> -> vector<2x64xf32>
    %cst_33 = arith.constant dense<0.000000e+00> : vector<2x128xf32>
    %194 = tpu.matmul %193, %1, %cst_33 {dimension_numbers = #tpu.dot_dimension_numbers<[1], [0], [0], [1], [0, 0, 1, 1], [], []>} : vector<2x64xf32>, vector<64x128xf32>, vector<2x128xf32> -> vector<2x128xf32>
    %195 = arith.addf %194, %4 : vector<2x128xf32>
    %196 = math.tanh %195 : vector<2x128xf32>
    %197 = arith.negf %195 : vector<2x128xf32>
    %198 = math.exp %197 : vector<2x128xf32>
    %cst_34 = arith.constant 1.000000e+00 : f32
    %199 = vector.broadcast %cst_34 : f32 to vector<2x128xf32>
    %200 = arith.addf %199, %198 : vector<2x128xf32>
    %201 = arith.divf %199, %200 : vector<2x128xf32>
    %202 = arith.select %10, %196, %201 : vector<2x128xi1>, vector<2x128xf32>
    %203 = vector.extract_strided_slice %202 {offsets = [0, 0], sizes = [2, 32], strides = [1, 1]} : vector<2x128xf32> to vector<2x32xf32>
    %204 = vector.extract_strided_slice %202 {offsets = [0, 32], sizes = [2, 32], strides = [1, 1]} : vector<2x128xf32> to vector<2x32xf32>
    %205 = vector.extract_strided_slice %202 {offsets = [0, 64], sizes = [2, 32], strides = [1, 1]} : vector<2x128xf32> to vector<2x32xf32>
    %206 = vector.extract_strided_slice %202 {offsets = [0, 96], sizes = [2, 32], strides = [1, 1]} : vector<2x128xf32> to vector<2x32xf32>
    %207 = arith.mulf %204, %169 : vector<2x32xf32>
    %208 = arith.mulf %203, %205 : vector<2x32xf32>
    %209 = arith.addf %207, %208 : vector<2x32xf32>
    %210 = math.tanh %209 : vector<2x32xf32>
    %211 = arith.mulf %206, %210 : vector<2x32xf32>
    %c5_i32 = arith.constant 5 : i32
    %212 = arith.index_cast %c5_i32 : i32 to index
    %c0_35 = arith.constant 0 : index
    %c0_36 = arith.constant 0 : index
    %213 = vector.load %arg1[%212, %c0_35, %c0_36] : memref<8x2x128xf32, #tpu.memory_space<vmem>>, vector<1x2x128xf32>
    %214 = vector.shape_cast %213 : vector<1x2x128xf32> to vector<2x128xf32>
    %cst_37 = arith.constant dense<0.000000e+00> : vector<2x128xf32>
    %215 = tpu.matmul %192, %0, %cst_37 {dimension_numbers = #tpu.dot_dimension_numbers<[1], [0], [0], [1], [0, 0, 1, 1], [], []>} : vector<2x32xf32>, vector<32x128xf32>, vector<2x128xf32> -> vector<2x128xf32>
    %216 = arith.addf %214, %215 : vector<2x128xf32>
    %217 = math.tanh %216 : vector<2x128xf32>
    %218 = arith.negf %216 : vector<2x128xf32>
    %219 = math.exp %218 : vector<2x128xf32>
    %cst_38 = arith.constant 1.000000e+00 : f32
    %220 = vector.broadcast %cst_38 : f32 to vector<2x128xf32>
    %221 = arith.addf %220, %219 : vector<2x128xf32>
    %222 = arith.divf %220, %221 : vector<2x128xf32>
    %223 = arith.select %10, %217, %222 : vector<2x128xi1>, vector<2x128xf32>
    %224 = vector.extract_strided_slice %223 {offsets = [0, 0], sizes = [2, 32], strides = [1, 1]} : vector<2x128xf32> to vector<2x32xf32>
    %225 = vector.extract_strided_slice %223 {offsets = [0, 32], sizes = [2, 32], strides = [1, 1]} : vector<2x128xf32> to vector<2x32xf32>
    %226 = vector.extract_strided_slice %223 {offsets = [0, 64], sizes = [2, 32], strides = [1, 1]} : vector<2x128xf32> to vector<2x32xf32>
    %227 = vector.extract_strided_slice %223 {offsets = [0, 96], sizes = [2, 32], strides = [1, 1]} : vector<2x128xf32> to vector<2x32xf32>
    %228 = arith.mulf %225, %190 : vector<2x32xf32>
    %229 = arith.mulf %224, %226 : vector<2x32xf32>
    %230 = arith.addf %228, %229 : vector<2x32xf32>
    %231 = math.tanh %230 : vector<2x32xf32>
    %232 = arith.mulf %227, %231 : vector<2x32xf32>
    %233 = tpu.concatenate %232, %211 in 1 : vector<2x32xf32>, vector<2x32xf32> -> vector<2x64xf32>
    %cst_39 = arith.constant dense<0.000000e+00> : vector<2x128xf32>
    %234 = tpu.matmul %233, %1, %cst_39 {dimension_numbers = #tpu.dot_dimension_numbers<[1], [0], [0], [1], [0, 0, 1, 1], [], []>} : vector<2x64xf32>, vector<64x128xf32>, vector<2x128xf32> -> vector<2x128xf32>
    %235 = arith.addf %234, %4 : vector<2x128xf32>
    %236 = math.tanh %235 : vector<2x128xf32>
    %237 = arith.negf %235 : vector<2x128xf32>
    %238 = math.exp %237 : vector<2x128xf32>
    %cst_40 = arith.constant 1.000000e+00 : f32
    %239 = vector.broadcast %cst_40 : f32 to vector<2x128xf32>
    %240 = arith.addf %239, %238 : vector<2x128xf32>
    %241 = arith.divf %239, %240 : vector<2x128xf32>
    %242 = arith.select %10, %236, %241 : vector<2x128xi1>, vector<2x128xf32>
    %243 = vector.extract_strided_slice %242 {offsets = [0, 0], sizes = [2, 32], strides = [1, 1]} : vector<2x128xf32> to vector<2x32xf32>
    %244 = vector.extract_strided_slice %242 {offsets = [0, 32], sizes = [2, 32], strides = [1, 1]} : vector<2x128xf32> to vector<2x32xf32>
    %245 = vector.extract_strided_slice %242 {offsets = [0, 64], sizes = [2, 32], strides = [1, 1]} : vector<2x128xf32> to vector<2x32xf32>
    %246 = vector.extract_strided_slice %242 {offsets = [0, 96], sizes = [2, 32], strides = [1, 1]} : vector<2x128xf32> to vector<2x32xf32>
    %247 = arith.mulf %244, %209 : vector<2x32xf32>
    %248 = arith.mulf %243, %245 : vector<2x32xf32>
    %249 = arith.addf %247, %248 : vector<2x32xf32>
    %250 = math.tanh %249 : vector<2x32xf32>
    %251 = arith.mulf %246, %250 : vector<2x32xf32>
    %c6_i32 = arith.constant 6 : i32
    %252 = arith.index_cast %c6_i32 : i32 to index
    %c0_41 = arith.constant 0 : index
    %c0_42 = arith.constant 0 : index
    %253 = vector.load %arg1[%252, %c0_41, %c0_42] : memref<8x2x128xf32, #tpu.memory_space<vmem>>, vector<1x2x128xf32>
    %254 = vector.shape_cast %253 : vector<1x2x128xf32> to vector<2x128xf32>
    %cst_43 = arith.constant dense<0.000000e+00> : vector<2x128xf32>
    %255 = tpu.matmul %232, %0, %cst_43 {dimension_numbers = #tpu.dot_dimension_numbers<[1], [0], [0], [1], [0, 0, 1, 1], [], []>} : vector<2x32xf32>, vector<32x128xf32>, vector<2x128xf32> -> vector<2x128xf32>
    %256 = arith.addf %254, %255 : vector<2x128xf32>
    %257 = math.tanh %256 : vector<2x128xf32>
    %258 = arith.negf %256 : vector<2x128xf32>
    %259 = math.exp %258 : vector<2x128xf32>
    %cst_44 = arith.constant 1.000000e+00 : f32
    %260 = vector.broadcast %cst_44 : f32 to vector<2x128xf32>
    %261 = arith.addf %260, %259 : vector<2x128xf32>
    %262 = arith.divf %260, %261 : vector<2x128xf32>
    %263 = arith.select %10, %257, %262 : vector<2x128xi1>, vector<2x128xf32>
    %264 = vector.extract_strided_slice %263 {offsets = [0, 0], sizes = [2, 32], strides = [1, 1]} : vector<2x128xf32> to vector<2x32xf32>
    %265 = vector.extract_strided_slice %263 {offsets = [0, 32], sizes = [2, 32], strides = [1, 1]} : vector<2x128xf32> to vector<2x32xf32>
    %266 = vector.extract_strided_slice %263 {offsets = [0, 64], sizes = [2, 32], strides = [1, 1]} : vector<2x128xf32> to vector<2x32xf32>
    %267 = vector.extract_strided_slice %263 {offsets = [0, 96], sizes = [2, 32], strides = [1, 1]} : vector<2x128xf32> to vector<2x32xf32>
    %268 = arith.mulf %265, %230 : vector<2x32xf32>
    %269 = arith.mulf %264, %266 : vector<2x32xf32>
    %270 = arith.addf %268, %269 : vector<2x32xf32>
    %271 = math.tanh %270 : vector<2x32xf32>
    %272 = arith.mulf %267, %271 : vector<2x32xf32>
    %273 = tpu.concatenate %272, %251 in 1 : vector<2x32xf32>, vector<2x32xf32> -> vector<2x64xf32>
    %cst_45 = arith.constant dense<0.000000e+00> : vector<2x128xf32>
    %274 = tpu.matmul %273, %1, %cst_45 {dimension_numbers = #tpu.dot_dimension_numbers<[1], [0], [0], [1], [0, 0, 1, 1], [], []>} : vector<2x64xf32>, vector<64x128xf32>, vector<2x128xf32> -> vector<2x128xf32>
    %275 = arith.addf %274, %4 : vector<2x128xf32>
    %276 = math.tanh %275 : vector<2x128xf32>
    %277 = arith.negf %275 : vector<2x128xf32>
    %278 = math.exp %277 : vector<2x128xf32>
    %cst_46 = arith.constant 1.000000e+00 : f32
    %279 = vector.broadcast %cst_46 : f32 to vector<2x128xf32>
    %280 = arith.addf %279, %278 : vector<2x128xf32>
    %281 = arith.divf %279, %280 : vector<2x128xf32>
    %282 = arith.select %10, %276, %281 : vector<2x128xi1>, vector<2x128xf32>
    %283 = vector.extract_strided_slice %282 {offsets = [0, 0], sizes = [2, 32], strides = [1, 1]} : vector<2x128xf32> to vector<2x32xf32>
    %284 = vector.extract_strided_slice %282 {offsets = [0, 32], sizes = [2, 32], strides = [1, 1]} : vector<2x128xf32> to vector<2x32xf32>
    %285 = vector.extract_strided_slice %282 {offsets = [0, 64], sizes = [2, 32], strides = [1, 1]} : vector<2x128xf32> to vector<2x32xf32>
    %286 = vector.extract_strided_slice %282 {offsets = [0, 96], sizes = [2, 32], strides = [1, 1]} : vector<2x128xf32> to vector<2x32xf32>
    %287 = arith.mulf %284, %249 : vector<2x32xf32>
    %288 = arith.mulf %283, %285 : vector<2x32xf32>
    %289 = arith.addf %287, %288 : vector<2x32xf32>
    %290 = math.tanh %289 : vector<2x32xf32>
    %291 = arith.mulf %286, %290 : vector<2x32xf32>
    %c7_i32 = arith.constant 7 : i32
    %292 = arith.index_cast %c7_i32 : i32 to index
    %c0_47 = arith.constant 0 : index
    %c0_48 = arith.constant 0 : index
    %293 = vector.load %arg1[%292, %c0_47, %c0_48] : memref<8x2x128xf32, #tpu.memory_space<vmem>>, vector<1x2x128xf32>
    %294 = vector.shape_cast %293 : vector<1x2x128xf32> to vector<2x128xf32>
    %cst_49 = arith.constant dense<0.000000e+00> : vector<2x128xf32>
    %295 = tpu.matmul %272, %0, %cst_49 {dimension_numbers = #tpu.dot_dimension_numbers<[1], [0], [0], [1], [0, 0, 1, 1], [], []>} : vector<2x32xf32>, vector<32x128xf32>, vector<2x128xf32> -> vector<2x128xf32>
    %296 = arith.addf %294, %295 : vector<2x128xf32>
    %297 = math.tanh %296 : vector<2x128xf32>
    %298 = arith.negf %296 : vector<2x128xf32>
    %299 = math.exp %298 : vector<2x128xf32>
    %cst_50 = arith.constant 1.000000e+00 : f32
    %300 = vector.broadcast %cst_50 : f32 to vector<2x128xf32>
    %301 = arith.addf %300, %299 : vector<2x128xf32>
    %302 = arith.divf %300, %301 : vector<2x128xf32>
    %303 = arith.select %10, %297, %302 : vector<2x128xi1>, vector<2x128xf32>
    %304 = vector.extract_strided_slice %303 {offsets = [0, 0], sizes = [2, 32], strides = [1, 1]} : vector<2x128xf32> to vector<2x32xf32>
    %305 = vector.extract_strided_slice %303 {offsets = [0, 32], sizes = [2, 32], strides = [1, 1]} : vector<2x128xf32> to vector<2x32xf32>
    %306 = vector.extract_strided_slice %303 {offsets = [0, 64], sizes = [2, 32], strides = [1, 1]} : vector<2x128xf32> to vector<2x32xf32>
    %307 = vector.extract_strided_slice %303 {offsets = [0, 96], sizes = [2, 32], strides = [1, 1]} : vector<2x128xf32> to vector<2x32xf32>
    %308 = arith.mulf %305, %270 : vector<2x32xf32>
    %309 = arith.mulf %304, %306 : vector<2x32xf32>
    %310 = arith.addf %308, %309 : vector<2x32xf32>
    %311 = math.tanh %310 : vector<2x32xf32>
    %312 = arith.mulf %307, %311 : vector<2x32xf32>
    %313 = tpu.concatenate %312, %291 in 1 : vector<2x32xf32>, vector<2x32xf32> -> vector<2x64xf32>
    %cst_51 = arith.constant dense<0.000000e+00> : vector<2x128xf32>
    %314 = tpu.matmul %313, %1, %cst_51 {dimension_numbers = #tpu.dot_dimension_numbers<[1], [0], [0], [1], [0, 0, 1, 1], [], []>} : vector<2x64xf32>, vector<64x128xf32>, vector<2x128xf32> -> vector<2x128xf32>
    %315 = arith.addf %314, %4 : vector<2x128xf32>
    %316 = math.tanh %315 : vector<2x128xf32>
    %317 = arith.negf %315 : vector<2x128xf32>
    %318 = math.exp %317 : vector<2x128xf32>
    %cst_52 = arith.constant 1.000000e+00 : f32
    %319 = vector.broadcast %cst_52 : f32 to vector<2x128xf32>
    %320 = arith.addf %319, %318 : vector<2x128xf32>
    %321 = arith.divf %319, %320 : vector<2x128xf32>
    %322 = arith.select %10, %316, %321 : vector<2x128xi1>, vector<2x128xf32>
    %323 = vector.extract_strided_slice %322 {offsets = [0, 0], sizes = [2, 32], strides = [1, 1]} : vector<2x128xf32> to vector<2x32xf32>
    %324 = vector.extract_strided_slice %322 {offsets = [0, 32], sizes = [2, 32], strides = [1, 1]} : vector<2x128xf32> to vector<2x32xf32>
    %325 = vector.extract_strided_slice %322 {offsets = [0, 64], sizes = [2, 32], strides = [1, 1]} : vector<2x128xf32> to vector<2x32xf32>
    %326 = vector.extract_strided_slice %322 {offsets = [0, 96], sizes = [2, 32], strides = [1, 1]} : vector<2x128xf32> to vector<2x32xf32>
    %327 = arith.mulf %324, %289 : vector<2x32xf32>
    %328 = arith.mulf %323, %325 : vector<2x32xf32>
    %329 = arith.addf %327, %328 : vector<2x32xf32>
    %330 = math.tanh %329 : vector<2x32xf32>
    %331 = arith.mulf %326, %330 : vector<2x32xf32>
    %c8_i32 = arith.constant 8 : i32
    %c0_53 = arith.constant 0 : index
    %c0_54 = arith.constant 0 : index
    %332 = vector.load %arg5[%c0_53, %c0_54] : memref<2x32xf32, #tpu.memory_space<vmem>>, vector<2x32xf32>
    tpu.vector_store %arg5[%c0_53, %c0_54], %331 {strides = array<i32>} : memref<2x32xf32, #tpu.memory_space<vmem>>, vector<2x32xf32>,
    return
  }
  func.func @transform_0(%arg0: i32) -> (i32, i32, i32) {
    %c0_i32 = arith.constant 0 : i32
    %c0_i32_0 = arith.constant 0 : i32
    %c0_i32_1 = arith.constant 0 : i32
    %c0_i32_2 = arith.constant 0 : i32
    return %c0_i32, %c0_i32_0, %c0_i32_1 : i32, i32, i32
  }
  func.func @transform_1(%arg0: i32) -> (i32, i32) {
    %c0_i32 = arith.constant 0 : i32
    %c0_i32_0 = arith.constant 0 : i32
    %c0_i32_1 = arith.constant 0 : i32
    return %c0_i32, %c0_i32_0 : i32, i32
  }
  func.func @transform_2(%arg0: i32) -> (i32, i32) {
    %c0_i32 = arith.constant 0 : i32
    %c0_i32_0 = arith.constant 0 : i32
    %c0_i32_1 = arith.constant 0 : i32
    return %c0_i32, %c0_i32_0 : i32, i32
  }
  func.func @transform_3(%arg0: i32) -> (i32, i32) {
    %c0_i32 = arith.constant 0 : i32
    %c0_i32_0 = arith.constant 0 : i32
    %c0_i32_1 = arith.constant 0 : i32
    return %c0_i32, %c0_i32_0 : i32, i32
  }
  func.func @transform_4(%arg0: i32) -> (i32, i32) {
    %c0_i32 = arith.constant 0 : i32
    %c0_i32_0 = arith.constant 0 : i32
    %c0_i32_1 = arith.constant 0 : i32
    return %c0_i32, %c0_i32_0 : i32, i32
  }
}

</mosaic_0001>

<llo_original>
// kernel: lstm_forward.1
$region0: #{lstm_forward.1}
  #allocation0 [shape = 'u32[]', space=smem, size = 0x4, offset = 0x4, fixed_abs, tag = 'smem constant byte address 0x4 - core index']
  #allocation1 [shape = 'u32[144,128]{1,0:T(1,128)}', space=vmem, size = 0x12000, scoped, tag = 'internal scratch']
  %s0 = inlined_call_operand.vmem [shape: f32[8,2,128], index: 0, kind: input, shape index: {}]
  %s1 = inlined_call_operand.vmem [shape: f32[32,128], index: 1, kind: input, shape index: {}]
  %s2 = inlined_call_operand.vmem [shape: f32[64,128], index: 2, kind: input, shape index: {}]
  %s3 = inlined_call_operand.vmem [shape: f32[1,128], index: 3, kind: input, shape index: {}]
  %s4 = inlined_call_operand.vmem [shape: f32[2,32], index: 4, kind: output, shape index: {}]
  %s5 = sld [smem:[#allocation0]]
  $region26: #{lstm_forward.1} parent=0
    _
  %s7 = ssub.s32 1, %s5
  %s8 = scalar_select 0, %s7, %s5
  // Predicated region
  $region2: #{lstm_forward.1} parent=0 // pred_check
    _
  $region3: #{lstm_forward.1} parent=0 // pred_check_branch
    %10 = sbr.rel (0) target = $region5
  $region4: #{lstm_forward.1} parent=0 // pred_region
    _
  $region5: #{lstm_forward.1} parent=0 // pred_fallthru
    _
  // Predicated region
  $region6: #{lstm_forward.1} parent=0 // pred_check
    _
  $region7: #{lstm_forward.1} parent=0 // pred_check_branch
    %12 = sbr.rel (0) target = $region9
  $region8: #{lstm_forward.1} parent=0 // pred_region
    _
  $region9: #{lstm_forward.1} parent=0 // pred_fallthru
    _
  // Predicated region
  $region10: #{lstm_forward.1} parent=0 // pred_check
    _
  $region11: #{lstm_forward.1} parent=0 // pred_check_branch
    %14 = sbr.rel (0) target = $region13
  $region12: #{lstm_forward.1} parent=0 // pred_region
    _
  $region13: #{lstm_forward.1} parent=0 // pred_fallthru
    _
  // Predicated region
  $region14: #{lstm_forward.1} parent=0 // pred_check
    _
  $region15: #{lstm_forward.1} parent=0 // pred_check_branch
    %16 = sbr.rel (0) target = $region17
  $region16: #{lstm_forward.1} parent=0 // pred_region
    _
  $region17: #{lstm_forward.1} parent=0 // pred_fallthru
    _
  %v17 = vld [vmem:[%s1] sm:$0xff]
  %v18 = vld [vmem:[%s1 + $0x8] sm:$0xff]
  %v19 = vld [vmem:[%s1 + $0x10] sm:$0xff]
  %v20 = vld [vmem:[%s1 + $0x18] sm:$0xff]
  %v21 = vld [vmem:[%s2] sm:$0xff]
  %v22 = vld [vmem:[%s2 + $0x8] sm:$0xff]
  %v23 = vld [vmem:[%s2 + $0x10] sm:$0xff]
  %v24 = vld [vmem:[%s2 + $0x18] sm:$0xff]
  %v25 = vld [vmem:[%s2 + $0x20] sm:$0xff]
  %v26 = vld [vmem:[%s2 + $0x28] sm:$0xff]
  %v27 = vld [vmem:[%s2 + $0x30] sm:$0xff]
  %v28 = vld [vmem:[%s2 + $0x38] sm:$0xff]
  %v29 = vld [vmem:[%s3] sm:$0x1]
  %v31 = vlaneseq
  %v32 = vshrl.u32 %v31, 7
  %v33 = vsub.s32 0, %v32
  %v34 = vrot.slane %v29, %v33
  %v36 = vlaneseq
  %v37 = vand.u32 %v36, 127
  %vm38 = vcmp.ge.s32.totalorder %v37, 64
  %vm39 = vcmp.lt.s32.totalorder %v37, 96
  %vm40 = vmand %vm38, %vm39
  %v41 = vld [vmem:[%s0] sm:$0x3]
  %vm42 = vcmask 261120
  %v44 = vsel %vm42, 0.0, 0
  %46 = vmatprep.subr.mxu0 0.0
  %47 = vmatpush1.msra.mxu0 %v17
  %48 = vmatprep.subr.mxu0 0.0
  %49 = vmatpush1.msra.mxu0 %v18
  %50 = vmatprep.subr.mxu0 0.0
  %51 = vmatpush1.msra.mxu0 %v19
  %52 = vmatprep.subr.mxu0 0.0
  %53 = vmatpush1.msra.mxu0 %v20
  %54 = vmatprep.subr.mxu0 0.0
  %55 = vmatpush1.msra.mxu0 0.0
  %56 = vmatprep.subr.mxu0 0.0
  %57 = vmatpush1.msra.mxu0 0.0
  %58 = vmatprep.subr.mxu0 0.0
  %59 = vmatpush1.msra.mxu0 0.0
  %60 = vmatprep.subr.mxu0 0.0
  %61 = vmatpush1.msra.mxu0 0.0
  %62 = vmatprep.subr.mxu0 0.0
  %63 = vmatpush1.msra.mxu0 0.0
  %64 = vmatprep.subr.mxu0 0.0
  %65 = vmatpush1.msra.mxu0 0.0
  %66 = vmatprep.subr.mxu0 0.0
  %67 = vmatpush1.msra.mxu0 0.0
  %68 = vmatprep.subr.mxu0 0.0
  %69 = vmatpush1.msra.mxu0 0.0
  %70 = vmatprep.subr.mxu0 0.0
  %71 = vmatpush1.msra.mxu0 0.0
  %72 = vmatprep.subr.mxu0 0.0
  %73 = vmatpush1.msra.mxu0 0.0
  %74 = vmatprep.subr.mxu0 0.0
  %75 = vmatpush1.msra.mxu0 0.0
  %76 = vmatprep.subr.mxu0 0.0
  %77 = vmatpush1.msra.mxu0 0.0
  %78 = vmatprep.subr.mxu0 0.0
  %79 = vmatpush1.msra.mxu0 0.0
  %80 = vmatprep.subr.mxu0 0.0
  %81 = vmatpush1.msra.mxu0 0.0
  %82 = vmatprep.subr.mxu0 0.0
  %83 = vmatpush1.msra.mxu0 0.0
  %84 = vmatprep.subr.mxu0 0.0
  %85 = vmatpush1.msra.mxu0 0.0
  %86 = vmatprep.subr.mxu0 0.0
  %87 = vmatpush1.msra.mxu0 0.0
  %88 = vmatprep.subr.mxu0 0.0
  %89 = vmatpush1.msra.mxu0 0.0
  %90 = vmatprep.subr.mxu0 0.0
  %91 = vmatpush1.msra.mxu0 0.0
  %92 = vmatprep.subr.mxu0 0.0
  %93 = vmatpush1.msra.mxu0 0.0
  %94 = vmatprep.subr.mxu0 0.0
  %95 = vmatpush1.msra.mxu0 0.0
  %96 = vmatprep.subr.mxu0 0.0
  %97 = vmatpush1.msra.mxu0 0.0
  %98 = vmatprep.subr.mxu0 0.0
  %99 = vmatpush1.msra.mxu0 0.0
  %100 = vmatprep.subr.mxu0 0.0
  %101 = vmatpush1.msra.mxu0 0.0
  %102 = vmatprep.subr.mxu0 0.0
  %103 = vmatpush1.msra.mxu0 0.0
  %104 = vmatprep.subr.mxu0 0.0
  %105 = vmatpush1.msra.mxu0 0.0
  %106 = vmatprep.subr.mxu0 0.0
  %107 = vmatpush1.msra.mxu0 0.0
  %108 = vmatprep.subr.mxu0 0.0
  %109 = vmatpush1.msra.mxu0 0.0
  %110 = vmatprep.mubr.f32.mxu0 0.0
  %111 = vmatmul.mubr.f32.gmra.mrb[0].mxu0 %v44
  %v112 = vpop.f32.mrb[0].mxu0
  %v113 = vadd.f32 0.0, %v112
  %v114 = vpop.f32.mrb[0].mxu0
  %115 = vdwg.mxu0
  %v116 = vadd.f32 %v41, %v113
  %v117 = vtanh.pop %v116
  %v118 = vxor.u32 %v116, 2147483648
  %v119 = vmul.f32 %v118, 1.442695
  %v120 = vpow.pop %v119
  %v121 = vadd.f32 %v120, 1.0
  %v122 = vrcp.pop %v121
  %v123 = vmul.f32 1.0, %v122
  %v124 = vsel %vm40, %v117, %v123
  %v125 = vmul.f32 %v124, 0.0
  %127 = vrot.lane.b32.xlu0 %v124, 64
  %v128 = vpop.permute.xlu0 %127
  %v130 = vmul.f32 %v124, %v128
  %132 = vrot.lane.b32.xlu0 %v130, 32
  %v133 = vpop.permute.xlu0 %132
  %v135 = vadd.f32 %v125, %v133
  %v136 = vtanh.pop %v135
  %138 = vrot.lane.b32.xlu0 %v136, 64
  %v139 = vpop.permute.xlu0 %138
  %v141 = vmul.f32 %v124, %v139
  %143 = vrot.lane.b32.xlu0 %v141, 32
  %v144 = vpop.permute.xlu0 %143
  %v146 = vsel %vm42, %v144, 0.0
  %vm147 = vcmask 523264
  %v149 = vsel %vm147, %v146, 0
  %151 = vmatprep.subr.mxu0 0.0
  %152 = vmatpush1.msra.mxu0 %v21
  %153 = vmatprep.subr.mxu0 0.0
  %154 = vmatpush1.msra.mxu0 %v22
  %155 = vmatprep.subr.mxu0 0.0
  %156 = vmatpush1.msra.mxu0 %v23
  %157 = vmatprep.subr.mxu0 0.0
  %158 = vmatpush1.msra.mxu0 %v24
  %159 = vmatprep.subr.mxu0 0.0
  %160 = vmatpush1.msra.mxu0 %v25
  %161 = vmatprep.subr.mxu0 0.0
  %162 = vmatpush1.msra.mxu0 %v26
  %163 = vmatprep.subr.mxu0 0.0
  %164 = vmatpush1.msra.mxu0 %v27
  %165 = vmatprep.subr.mxu0 0.0
  %166 = vmatpush1.msra.mxu0 %v28
  %167 = vmatprep.subr.mxu0 0.0
  %168 = vmatpush1.msra.mxu0 0.0
  %169 = vmatprep.subr.mxu0 0.0
  %170 = vmatpush1.msra.mxu0 0.0
  %171 = vmatprep.subr.mxu0 0.0
  %172 = vmatpush1.msra.mxu0 0.0
  %173 = vmatprep.subr.mxu0 0.0
  %174 = vmatpush1.msra.mxu0 0.0
  %175 = vmatprep.subr.mxu0 0.0
  %176 = vmatpush1.msra.mxu0 0.0
  %177 = vmatprep.subr.mxu0 0.0
  %178 = vmatpush1.msra.mxu0 0.0
  %179 = vmatprep.subr.mxu0 0.0
  %180 = vmatpush1.msra.mxu0 0.0
  %181 = vmatprep.subr.mxu0 0.0
  %182 = vmatpush1.msra.mxu0 0.0
  %183 = vmatprep.subr.mxu0 0.0
  %184 = vmatpush1.msra.mxu0 0.0
  %185 = vmatprep.subr.mxu0 0.0
  %186 = vmatpush1.msra.mxu0 0.0
  %187 = vmatprep.subr.mxu0 0.0
  %188 = vmatpush1.msra.mxu0 0.0
  %189 = vmatprep.subr.mxu0 0.0
  %190 = vmatpush1.msra.mxu0 0.0
  %191 = vmatprep.subr.mxu0 0.0
  %192 = vmatpush1.msra.mxu0 0.0
  %193 = vmatprep.subr.mxu0 0.0
  %194 = vmatpush1.msra.mxu0 0.0
  %195 = vmatprep.subr.mxu0 0.0
  %196 = vmatpush1.msra.mxu0 0.0
  %197 = vmatprep.subr.mxu0 0.0
  %198 = vmatpush1.msra.mxu0 0.0
  %199 = vmatprep.subr.mxu0 0.0
  %200 = vmatpush1.msra.mxu0 0.0
  %201 = vmatprep.subr.mxu0 0.0
  %202 = vmatpush1.msra.mxu0 0.0
  %203 = vmatprep.subr.mxu0 0.0
  %204 = vmatpush1.msra.mxu0 0.0
  %205 = vmatprep.subr.mxu0 0.0
  %206 = vmatpush1.msra.mxu0 0.0
  %207 = vmatprep.subr.mxu0 0.0
  %208 = vmatpush1.msra.mxu0 0.0
  %209 = vmatprep.subr.mxu0 0.0
  %210 = vmatpush1.msra.mxu0 0.0
  %211 = vmatprep.subr.mxu0 0.0
  %212 = vmatpush1.msra.mxu0 0.0
  %213 = vmatprep.subr.mxu0 0.0
  %214 = vmatpush1.msra.mxu0 0.0
  %215 = vmatprep.mubr.f32.mxu0 0.0
  %216 = vmatmul.mubr.f32.gmra.mrb[0].mxu0 %v149
  %v217 = vpop.f32.mrb[0].mxu0
  %v218 = vadd.f32 %v34, %v217
  %v219 = vpop.f32.mrb[0].mxu0
  %220 = vdwg.mxu0
  %v221 = vtanh.pop %v218
  %v222 = vxor.u32 %v218, 2147483648
  %v223 = vmul.f32 %v222, 1.442695
  %v224 = vpow.pop %v223
  %v225 = vadd.f32 %v224, 1.0
  %v226 = vrcp.pop %v225
  %v227 = vmul.f32 1.0, %v226
  %v228 = vsel %vm40, %v221, %v227
  %v229 = vmul.f32 %v228, 0.0
  %231 = vrot.lane.b32.xlu0 %v228, 64
  %v232 = vpop.permute.xlu0 %231
  %v234 = vmul.f32 %v228, %v232
  %236 = vrot.lane.b32.xlu0 %v234, 32
  %v237 = vpop.permute.xlu0 %236
  %v239 = vadd.f32 %v229, %v237
  %v240 = vtanh.pop %v239
  %242 = vrot.lane.b32.xlu0 %v240, 64
  %v243 = vpop.permute.xlu0 %242
  %v245 = vmul.f32 %v228, %v243
  %s246 = scalar_lea.vmem %s0, 2
  %v247 = vld [vmem:[%s246] sm:$0x3]
  %v248 = vsel %vm42, %v144, 0
  %250 = vmatprep.subr.mxu0 0.0
  %251 = vmatpush1.msra.mxu0 %v17
  %252 = vmatprep.subr.mxu0 0.0
  %253 = vmatpush1.msra.mxu0 %v18
  %254 = vmatprep.subr.mxu0 0.0
  %255 = vmatpush1.msra.mxu0 %v19
  %256 = vmatprep.subr.mxu0 0.0
  %257 = vmatpush1.msra.mxu0 %v20
  %258 = vmatprep.subr.mxu0 0.0
  %259 = vmatpush1.msra.mxu0 0.0
  %260 = vmatprep.subr.mxu0 0.0
  %261 = vmatpush1.msra.mxu0 0.0
  %262 = vmatprep.subr.mxu0 0.0
  %263 = vmatpush1.msra.mxu0 0.0
  %264 = vmatprep.subr.mxu0 0.0
  %265 = vmatpush1.msra.mxu0 0.0
  %266 = vmatprep.subr.mxu0 0.0
  %267 = vmatpush1.msra.mxu0 0.0
  %268 = vmatprep.subr.mxu0 0.0
  %269 = vmatpush1.msra.mxu0 0.0
  %270 = vmatprep.subr.mxu0 0.0
  %271 = vmatpush1.msra.mxu0 0.0
  %272 = vmatprep.subr.mxu0 0.0
  %273 = vmatpush1.msra.mxu0 0.0
  %274 = vmatprep.subr.mxu0 0.0
  %275 = vmatpush1.msra.mxu0 0.0
  %276 = vmatprep.subr.mxu0 0.0
  %277 = vmatpush1.msra.mxu0 0.0
  %278 = vmatprep.subr.mxu0 0.0
  %279 = vmatpush1.msra.mxu0 0.0
  %280 = vmatprep.subr.mxu0 0.0
  %281 = vmatpush1.msra.mxu0 0.0
  %282 = vmatprep.subr.mxu0 0.0
  %283 = vmatpush1.msra.mxu0 0.0
  %284 = vmatprep.subr.mxu0 0.0
  %285 = vmatpush1.msra.mxu0 0.0
  %286 = vmatprep.subr.mxu0 0.0
  %287 = vmatpush1.msra.mxu0 0.0
  %288 = vmatprep.subr.mxu0 0.0
  %289 = vmatpush1.msra.mxu0 0.0
  %290 = vmatprep.subr.mxu0 0.0
  %291 = vmatpush1.msra.mxu0 0.0
  %292 = vmatprep.subr.mxu0 0.0
  %293 = vmatpush1.msra.mxu0 0.0
  %294 = vmatprep.subr.mxu0 0.0
  %295 = vmatpush1.msra.mxu0 0.0
  %296 = vmatprep.subr.mxu0 0.0
  %297 = vmatpush1.msra.mxu0 0.0
  %298 = vmatprep.subr.mxu0 0.0
  %299 = vmatpush1.msra.mxu0 0.0
  %300 = vmatprep.subr.mxu0 0.0
  %301 = vmatpush1.msra.mxu0 0.0
  %302 = vmatprep.subr.mxu0 0.0
  %303 = vmatpush1.msra.mxu0 0.0
  %304 = vmatprep.subr.mxu0 0.0
  %305 = vmatpush1.msra.mxu0 0.0
  %306 = vmatprep.subr.mxu0 0.0
  %307 = vmatpush1.msra.mxu0 0.0
  %308 = vmatprep.subr.mxu0 0.0
  %309 = vmatpush1.msra.mxu0 0.0
  %310 = vmatprep.subr.mxu0 0.0
  %311 = vmatpush1.msra.mxu0 0.0
  %312 = vmatprep.subr.mxu0 0.0
  %313 = vmatpush1.msra.mxu0 0.0
  %314 = vmatprep.mubr.f32.mxu0 0.0
  %315 = vmatmul.mubr.f32.gmra.mrb[0].mxu0 %v248
  %v316 = vpop.f32.mrb[0].mxu0
  %v317 = vadd.f32 0.0, %v316
  %v318 = vpop.f32.mrb[0].mxu0
  %319 = vdwg.mxu0
  %v320 = vadd.f32 %v247, %v317
  %v321 = vtanh.pop %v320
  %v322 = vxor.u32 %v320, 2147483648
  %v323 = vmul.f32 %v322, 1.442695
  %v324 = vpow.pop %v323
  %v325 = vadd.f32 %v324, 1.0
  %v326 = vrcp.pop %v325
  %v327 = vmul.f32 1.0, %v326
  %v328 = vsel %vm40, %v321, %v327
  %v329 = vmul.f32 %v328, %v135
  %331 = vrot.lane.b32.xlu0 %v328, 64
  %v332 = vpop.permute.xlu0 %331
  %v334 = vmul.f32 %v328, %v332
  %336 = vrot.lane.b32.xlu0 %v334, 32
  %v337 = vpop.permute.xlu0 %336
  %v339 = vadd.f32 %v329, %v337
  %v340 = vtanh.pop %v339
  %342 = vrot.lane.b32.xlu0 %v340, 64
  %v343 = vpop.permute.xlu0 %342
  %v345 = vmul.f32 %v328, %v343
  %347 = vrot.lane.b32.xlu0 %v345, 32
  %v348 = vpop.permute.xlu0 %347
  %351 = vrot.lane.b32.xlu0 %v245, 64
  %v352 = vpop.permute.xlu0 %351
  %v354 = vsel %vm42, %v348, %v352
  %v356 = vsel %vm147, %v354, 0
  %358 = vmatprep.subr.mxu0 0.0
  %359 = vmatpush1.msra.mxu0 %v21
  %360 = vmatprep.subr.mxu0 0.0
  %361 = vmatpush1.msra.mxu0 %v22
  %362 = vmatprep.subr.mxu0 0.0
  %363 = vmatpush1.msra.mxu0 %v23
  %364 = vmatprep.subr.mxu0 0.0
  %365 = vmatpush1.msra.mxu0 %v24
  %366 = vmatprep.subr.mxu0 0.0
  %367 = vmatpush1.msra.mxu0 %v25
  %368 = vmatprep.subr.mxu0 0.0
  %369 = vmatpush1.msra.mxu0 %v26
  %370 = vmatprep.subr.mxu0 0.0
  %371 = vmatpush1.msra.mxu0 %v27
  %372 = vmatprep.subr.mxu0 0.0
  %373 = vmatpush1.msra.mxu0 %v28
  %374 = vmatprep.subr.mxu0 0.0
  %375 = vmatpush1.msra.mxu0 0.0
  %376 = vmatprep.subr.mxu0 0.0
  %377 = vmatpush1.msra.mxu0 0.0
  %378 = vmatprep.subr.mxu0 0.0
  %379 = vmatpush1.msra.mxu0 0.0
  %380 = vmatprep.subr.mxu0 0.0
  %381 = vmatpush1.msra.mxu0 0.0
  %382 = vmatprep.subr.mxu0 0.0
  %383 = vmatpush1.msra.mxu0 0.0
  %384 = vmatprep.subr.mxu0 0.0
  %385 = vmatpush1.msra.mxu0 0.0
  %386 = vmatprep.subr.mxu0 0.0
  %387 = vmatpush1.msra.mxu0 0.0
  %388 = vmatprep.subr.mxu0 0.0
  %389 = vmatpush1.msra.mxu0 0.0
  %390 = vmatprep.subr.mxu0 0.0
  %391 = vmatpush1.msra.mxu0 0.0
  %392 = vmatprep.subr.mxu0 0.0
  %393 = vmatpush1.msra.mxu0 0.0
  %394 = vmatprep.subr.mxu0 0.0
  %395 = vmatpush1.msra.mxu0 0.0
  %396 = vmatprep.subr.mxu0 0.0
  %397 = vmatpush1.msra.mxu0 0.0
  %398 = vmatprep.subr.mxu0 0.0
  %399 = vmatpush1.msra.mxu0 0.0
  %400 = vmatprep.subr.mxu0 0.0
  %401 = vmatpush1.msra.mxu0 0.0
  %402 = vmatprep.subr.mxu0 0.0
  %403 = vmatpush1.msra.mxu0 0.0
  %404 = vmatprep.subr.mxu0 0.0
  %405 = vmatpush1.msra.mxu0 0.0
  %406 = vmatprep.subr.mxu0 0.0
  %407 = vmatpush1.msra.mxu0 0.0
  %408 = vmatprep.subr.mxu0 0.0
  %409 = vmatpush1.msra.mxu0 0.0
  %410 = vmatprep.subr.mxu0 0.0
  %411 = vmatpush1.msra.mxu0 0.0
  %412 = vmatprep.subr.mxu0 0.0
  %413 = vmatpush1.msra.mxu0 0.0
  %414 = vmatprep.subr.mxu0 0.0
  %415 = vmatpush1.msra.mxu0 0.0
  %416 = vmatprep.subr.mxu0 0.0
  %417 = vmatpush1.msra.mxu0 0.0
  %418 = vmatprep.subr.mxu0 0.0
  %419 = vmatpush1.msra.mxu0 0.0
  %420 = vmatprep.subr.mxu0 0.0
  %421 = vmatpush1.msra.mxu0 0.0
  %422 = vmatprep.mubr.f32.mxu0 0.0
  %423 = vmatmul.mubr.f32.gmra.mrb[0].mxu0 %v356
  %v424 = vpop.f32.mrb[0].mxu0
  %v425 = vadd.f32 %v34, %v424
  %v426 = vpop.f32.mrb[0].mxu0
  %427 = vdwg.mxu0
  %v428 = vtanh.pop %v425
  %v429 = vxor.u32 %v425, 2147483648
  %v430 = vmul.f32 %v429, 1.442695
  %v431 = vpow.pop %v430
  %v432 = vadd.f32 %v431, 1.0
  %v433 = vrcp.pop %v432
  %v434 = vmul.f32 1.0, %v433
  %v435 = vsel %vm40, %v428, %v434
  %v436 = vmul.f32 %v435, %v239
  %438 = vrot.lane.b32.xlu0 %v435, 64
  %v439 = vpop.permute.xlu0 %438
  %v441 = vmul.f32 %v435, %v439
  %443 = vrot.lane.b32.xlu0 %v441, 32
  %v444 = vpop.permute.xlu0 %443
  %v446 = vadd.f32 %v436, %v444
  %v447 = vtanh.pop %v446
  %449 = vrot.lane.b32.xlu0 %v447, 64
  %v450 = vpop.permute.xlu0 %449
  %v452 = vmul.f32 %v435, %v450
  %s453 = scalar_lea.vmem %s0, 4
  %v454 = vld [vmem:[%s453] sm:$0x3]
  %v455 = vsel %vm42, %v348, 0
  %457 = vmatprep.subr.mxu0 0.0
  %458 = vmatpush1.msra.mxu0 %v17
  %459 = vmatprep.subr.mxu0 0.0
  %460 = vmatpush1.msra.mxu0 %v18
  %461 = vmatprep.subr.mxu0 0.0
  %462 = vmatpush1.msra.mxu0 %v19
  %463 = vmatprep.subr.mxu0 0.0
  %464 = vmatpush1.msra.mxu0 %v20
  %465 = vmatprep.subr.mxu0 0.0
  %466 = vmatpush1.msra.mxu0 0.0
  %467 = vmatprep.subr.mxu0 0.0
  %468 = vmatpush1.msra.mxu0 0.0
  %469 = vmatprep.subr.mxu0 0.0
  %470 = vmatpush1.msra.mxu0 0.0
  %471 = vmatprep.subr.mxu0 0.0
  %472 = vmatpush1.msra.mxu0 0.0
  %473 = vmatprep.subr.mxu0 0.0
  %474 = vmatpush1.msra.mxu0 0.0
  %475 = vmatprep.subr.mxu0 0.0
  %476 = vmatpush1.msra.mxu0 0.0
  %477 = vmatprep.subr.mxu0 0.0
  %478 = vmatpush1.msra.mxu0 0.0
  %479 = vmatprep.subr.mxu0 0.0
  %480 = vmatpush1.msra.mxu0 0.0
  %481 = vmatprep.subr.mxu0 0.0
  %482 = vmatpush1.msra.mxu0 0.0
  %483 = vmatprep.subr.mxu0 0.0
  %484 = vmatpush1.msra.mxu0 0.0
  %485 = vmatprep.subr.mxu0 0.0
  %486 = vmatpush1.msra.mxu0 0.0
  %487 = vmatprep.subr.mxu0 0.0
  %488 = vmatpush1.msra.mxu0 0.0
  %489 = vmatprep.subr.mxu0 0.0
  %490 = vmatpush1.msra.mxu0 0.0
  %491 = vmatprep.subr.mxu0 0.0
  %492 = vmatpush1.msra.mxu0 0.0
  %493 = vmatprep.subr.mxu0 0.0
  %494 = vmatpush1.msra.mxu0 0.0
  %495 = vmatprep.subr.mxu0 0.0
  %496 = vmatpush1.msra.mxu0 0.0
  %497 = vmatprep.subr.mxu0 0.0
  %498 = vmatpush1.msra.mxu0 0.0
  %499 = vmatprep.subr.mxu0 0.0
  %500 = vmatpush1.msra.mxu0 0.0
  %501 = vmatprep.subr.mxu0 0.0
  %502 = vmatpush1.msra.mxu0 0.0
  %503 = vmatprep.subr.mxu0 0.0
  %504 = vmatpush1.msra.mxu0 0.0
  %505 = vmatprep.subr.mxu0 0.0
  %506 = vmatpush1.msra.mxu0 0.0
  %507 = vmatprep.subr.mxu0 0.0
  %508 = vmatpush1.msra.mxu0 0.0
  %509 = vmatprep.subr.mxu0 0.0
  %510 = vmatpush1.msra.mxu0 0.0
  %511 = vmatprep.subr.mxu0 0.0
  %512 = vmatpush1.msra.mxu0 0.0
  %513 = vmatprep.subr.mxu0 0.0
  %514 = vmatpush1.msra.mxu0 0.0
  %515 = vmatprep.subr.mxu0 0.0
  %516 = vmatpush1.msra.mxu0 0.0
  %517 = vmatprep.subr.mxu0 0.0
  %518 = vmatpush1.msra.mxu0 0.0
  %519 = vmatprep.subr.mxu0 0.0
  %520 = vmatpush1.msra.mxu0 0.0
  %521 = vmatprep.mubr.f32.mxu0 0.0
  %522 = vmatmul.mubr.f32.gmra.mrb[0].mxu0 %v455
  %v523 = vpop.f32.mrb[0].mxu0
  %v524 = vadd.f32 0.0, %v523
  %v525 = vpop.f32.mrb[0].mxu0
  %526 = vdwg.mxu0
  %v527 = vadd.f32 %v454, %v524
  %v528 = vtanh.pop %v527
  %v529 = vxor.u32 %v527, 2147483648
  %v530 = vmul.f32 %v529, 1.442695
  %v531 = vpow.pop %v530
  %v532 = vadd.f32 %v531, 1.0
  %v533 = vrcp.pop %v532
  %v534 = vmul.f32 1.0, %v533
  %v535 = vsel %vm40, %v528, %v534
  %v536 = vmul.f32 %v535, %v339
  %538 = vrot.lane.b32.xlu0 %v535, 64
  %v539 = vpop.permute.xlu0 %538
  %v541 = vmul.f32 %v535, %v539
  %543 = vrot.lane.b32.xlu0 %v541, 32
  %v544 = vpop.permute.xlu0 %543
  %v546 = vadd.f32 %v536, %v544
  %v547 = vtanh.pop %v546
  %549 = vrot.lane.b32.xlu0 %v547, 64
  %v550 = vpop.permute.xlu0 %549
  %v552 = vmul.f32 %v535, %v550
  %554 = vrot.lane.b32.xlu0 %v552, 32
  %v555 = vpop.permute.xlu0 %554
  %558 = vrot.lane.b32.xlu0 %v452, 64
  %v559 = vpop.permute.xlu0 %558
  %v561 = vsel %vm42, %v555, %v559
  %v563 = vsel %vm147, %v561, 0
  %565 = vmatprep.subr.mxu0 0.0
  %566 = vmatpush1.msra.mxu0 %v21
  %567 = vmatprep.subr.mxu0 0.0
  %568 = vmatpush1.msra.mxu0 %v22
  %569 = vmatprep.subr.mxu0 0.0
  %570 = vmatpush1.msra.mxu0 %v23
  %571 = vmatprep.subr.mxu0 0.0
  %572 = vmatpush1.msra.mxu0 %v24
  %573 = vmatprep.subr.mxu0 0.0
  %574 = vmatpush1.msra.mxu0 %v25
  %575 = vmatprep.subr.mxu0 0.0
  %576 = vmatpush1.msra.mxu0 %v26
  %577 = vmatprep.subr.mxu0 0.0
  %578 = vmatpush1.msra.mxu0 %v27
  %579 = vmatprep.subr.mxu0 0.0
  %580 = vmatpush1.msra.mxu0 %v28
  %581 = vmatprep.subr.mxu0 0.0
  %582 = vmatpush1.msra.mxu0 0.0
  %583 = vmatprep.subr.mxu0 0.0
  %584 = vmatpush1.msra.mxu0 0.0
  %585 = vmatprep.subr.mxu0 0.0
  %586 = vmatpush1.msra.mxu0 0.0
  %587 = vmatprep.subr.mxu0 0.0
  %588 = vmatpush1.msra.mxu0 0.0
  %589 = vmatprep.subr.mxu0 0.0
  %590 = vmatpush1.msra.mxu0 0.0
  %591 = vmatprep.subr.mxu0 0.0
  %592 = vmatpush1.msra.mxu0 0.0
  %593 = vmatprep.subr.mxu0 0.0
  %594 = vmatpush1.msra.mxu0 0.0
  %595 = vmatprep.subr.mxu0 0.0
  %596 = vmatpush1.msra.mxu0 0.0
  %597 = vmatprep.subr.mxu0 0.0
  %598 = vmatpush1.msra.mxu0 0.0
  %599 = vmatprep.subr.mxu0 0.0
  %600 = vmatpush1.msra.mxu0 0.0
  %601 = vmatprep.subr.mxu0 0.0
  %602 = vmatpush1.msra.mxu0 0.0
  %603 = vmatprep.subr.mxu0 0.0
  %604 = vmatpush1.msra.mxu0 0.0
  %605 = vmatprep.subr.mxu0 0.0
  %606 = vmatpush1.msra.mxu0 0.0
  %607 = vmatprep.subr.mxu0 0.0
  %608 = vmatpush1.msra.mxu0 0.0
  %609 = vmatprep.subr.mxu0 0.0
  %610 = vmatpush1.msra.mxu0 0.0
  %611 = vmatprep.subr.mxu0 0.0
  %612 = vmatpush1.msra.mxu0 0.0
  %613 = vmatprep.subr.mxu0 0.0
  %614 = vmatpush1.msra.mxu0 0.0
  %615 = vmatprep.subr.mxu0 0.0
  %616 = vmatpush1.msra.mxu0 0.0
  %617 = vmatprep.subr.mxu0 0.0
  %618 = vmatpush1.msra.mxu0 0.0
  %619 = vmatprep.subr.mxu0 0.0
  %620 = vmatpush1.msra.mxu0 0.0
  %621 = vmatprep.subr.mxu0 0.0
  %622 = vmatpush1.msra.mxu0 0.0
  %623 = vmatprep.subr.mxu0 0.0
  %624 = vmatpush1.msra.mxu0 0.0
  %625 = vmatprep.subr.mxu0 0.0
  %626 = vmatpush1.msra.mxu0 0.0
  %627 = vmatprep.subr.mxu0 0.0
  %628 = vmatpush1.msra.mxu0 0.0
  %629 = vmatprep.mubr.f32.mxu0 0.0
  %630 = vmatmul.mubr.f32.gmra.mrb[0].mxu0 %v563
  %v631 = vpop.f32.mrb[0].mxu0
  %v632 = vadd.f32 %v34, %v631
  %v633 = vpop.f32.mrb[0].mxu0
  %634 = vdwg.mxu0
  %v635 = vtanh.pop %v632
  %v636 = vxor.u32 %v632, 2147483648
  %v637 = vmul.f32 %v636, 1.442695
  %v638 = vpow.pop %v637
  %v639 = vadd.f32 %v638, 1.0
  %v640 = vrcp.pop %v639
  %v641 = vmul.f32 1.0, %v640
  %v642 = vsel %vm40, %v635, %v641
  %v643 = vmul.f32 %v642, %v446
  %645 = vrot.lane.b32.xlu0 %v642, 64
  %v646 = vpop.permute.xlu0 %645
  %v648 = vmul.f32 %v642, %v646
  %650 = vrot.lane.b32.xlu0 %v648, 32
  %v651 = vpop.permute.xlu0 %650
  %v653 = vadd.f32 %v643, %v651
  %v654 = vtanh.pop %v653
  %656 = vrot.lane.b32.xlu0 %v654, 64
  %v657 = vpop.permute.xlu0 %656
  %v659 = vmul.f32 %v642, %v657
  %s660 = scalar_lea.vmem %s0, 6
  %v661 = vld [vmem:[%s660] sm:$0x3]
  %v662 = vsel %vm42, %v555, 0
  %664 = vmatprep.subr.mxu0 0.0
  %665 = vmatpush1.msra.mxu0 %v17
  %666 = vmatprep.subr.mxu0 0.0
  %667 = vmatpush1.msra.mxu0 %v18
  %668 = vmatprep.subr.mxu0 0.0
  %669 = vmatpush1.msra.mxu0 %v19
  %670 = vmatprep.subr.mxu0 0.0
  %671 = vmatpush1.msra.mxu0 %v20
  %672 = vmatprep.subr.mxu0 0.0
  %673 = vmatpush1.msra.mxu0 0.0
  %674 = vmatprep.subr.mxu0 0.0
  %675 = vmatpush1.msra.mxu0 0.0
  %676 = vmatprep.subr.mxu0 0.0
  %677 = vmatpush1.msra.mxu0 0.0
  %678 = vmatprep.subr.mxu0 0.0
  %679 = vmatpush1.msra.mxu0 0.0
  %680 = vmatprep.subr.mxu0 0.0
  %681 = vmatpush1.msra.mxu0 0.0
  %682 = vmatprep.subr.mxu0 0.0
  %683 = vmatpush1.msra.mxu0 0.0
  %684 = vmatprep.subr.mxu0 0.0
  %685 = vmatpush1.msra.mxu0 0.0
  %686 = vmatprep.subr.mxu0 0.0
  %687 = vmatpush1.msra.mxu0 0.0
  %688 = vmatprep.subr.mxu0 0.0
  %689 = vmatpush1.msra.mxu0 0.0
  %690 = vmatprep.subr.mxu0 0.0
  %691 = vmatpush1.msra.mxu0 0.0
  %692 = vmatprep.subr.mxu0 0.0
  %693 = vmatpush1.msra.mxu0 0.0
  %694 = vmatprep.subr.mxu0 0.0
  %695 = vmatpush1.msra.mxu0 0.0
  %696 = vmatprep.subr.mxu0 0.0
  %697 = vmatpush1.msra.mxu0 0.0
  %698 = vmatprep.subr.mxu0 0.0
  %699 = vmatpush1.msra.mxu0 0.0
  %700 = vmatprep.subr.mxu0 0.0
  %701 = vmatpush1.msra.mxu0 0.0
  %702 = vmatprep.subr.mxu0 0.0
  %703 = vmatpush1.msra.mxu0 0.0
  %704 = vmatprep.subr.mxu0 0.0
  %705 = vmatpush1.msra.mxu0 0.0
  %706 = vmatprep.subr.mxu0 0.0
  %707 = vmatpush1.msra.mxu0 0.0
  %708 = vmatprep.subr.mxu0 0.0
  %709 = vmatpush1.msra.mxu0 0.0
  %710 = vmatprep.subr.mxu0 0.0
  %711 = vmatpush1.msra.mxu0 0.0
  %712 = vmatprep.subr.mxu0 0.0
  %713 = vmatpush1.msra.mxu0 0.0
  %714 = vmatprep.subr.mxu0 0.0
  %715 = vmatpush1.msra.mxu0 0.0
  %716 = vmatprep.subr.mxu0 0.0
  %717 = vmatpush1.msra.mxu0 0.0
  %718 = vmatprep.subr.mxu0 0.0
  %719 = vmatpush1.msra.mxu0 0.0
  %720 = vmatprep.subr.mxu0 0.0
  %721 = vmatpush1.msra.mxu0 0.0
  %722 = vmatprep.subr.mxu0 0.0
  %723 = vmatpush1.msra.mxu0 0.0
  %724 = vmatprep.subr.mxu0 0.0
  %725 = vmatpush1.msra.mxu0 0.0
  %726 = vmatprep.subr.mxu0 0.0
  %727 = vmatpush1.msra.mxu0 0.0
  %728 = vmatprep.mubr.f32.mxu0 0.0
  %729 = vmatmul.mubr.f32.gmra.mrb[0].mxu0 %v662
  %v730 = vpop.f32.mrb[0].mxu0
  %v731 = vadd.f32 0.0, %v730
  %v732 = vpop.f32.mrb[0].mxu0
  %733 = vdwg.mxu0
  %v734 = vadd.f32 %v661, %v731
  %v735 = vtanh.pop %v734
  %v736 = vxor.u32 %v734, 2147483648
  %v737 = vmul.f32 %v736, 1.442695
  %v738 = vpow.pop %v737
  %v739 = vadd.f32 %v738, 1.0
  %v740 = vrcp.pop %v739
  %v741 = vmul.f32 1.0, %v740
  %v742 = vsel %vm40, %v735, %v741
  %v743 = vmul.f32 %v742, %v546
  %745 = vrot.lane.b32.xlu0 %v742, 64
  %v746 = vpop.permute.xlu0 %745
  %v748 = vmul.f32 %v742, %v746
  %750 = vrot.lane.b32.xlu0 %v748, 32
  %v751 = vpop.permute.xlu0 %750
  %v753 = vadd.f32 %v743, %v751
  %v754 = vtanh.pop %v753
  %756 = vrot.lane.b32.xlu0 %v754, 64
  %v757 = vpop.permute.xlu0 %756
  %v759 = vmul.f32 %v742, %v757
  %761 = vrot.lane.b32.xlu0 %v759, 32
  %v762 = vpop.permute.xlu0 %761
  %765 = vrot.lane.b32.xlu0 %v659, 64
  %v766 = vpop.permute.xlu0 %765
  %v768 = vsel %vm42, %v762, %v766
  %v770 = vsel %vm147, %v768, 0
  %772 = vmatprep.subr.mxu0 0.0
  %773 = vmatpush1.msra.mxu0 %v21
  %774 = vmatprep.subr.mxu0 0.0
  %775 = vmatpush1.msra.mxu0 %v22
  %776 = vmatprep.subr.mxu0 0.0
  %777 = vmatpush1.msra.mxu0 %v23
  %778 = vmatprep.subr.mxu0 0.0
  %779 = vmatpush1.msra.mxu0 %v24
  %780 = vmatprep.subr.mxu0 0.0
  %781 = vmatpush1.msra.mxu0 %v25
  %782 = vmatprep.subr.mxu0 0.0
  %783 = vmatpush1.msra.mxu0 %v26
  %784 = vmatprep.subr.mxu0 0.0
  %785 = vmatpush1.msra.mxu0 %v27
  %786 = vmatprep.subr.mxu0 0.0
  %787 = vmatpush1.msra.mxu0 %v28
  %788 = vmatprep.subr.mxu0 0.0
  %789 = vmatpush1.msra.mxu0 0.0
  %790 = vmatprep.subr.mxu0 0.0
  %791 = vmatpush1.msra.mxu0 0.0
  %792 = vmatprep.subr.mxu0 0.0
  %793 = vmatpush1.msra.mxu0 0.0
  %794 = vmatprep.subr.mxu0 0.0
  %795 = vmatpush1.msra.mxu0 0.0
  %796 = vmatprep.subr.mxu0 0.0
  %797 = vmatpush1.msra.mxu0 0.0
  %798 = vmatprep.subr.mxu0 0.0
  %799 = vmatpush1.msra.mxu0 0.0
  %800 = vmatprep.subr.mxu0 0.0
  %801 = vmatpush1.msra.mxu0 0.0
  %802 = vmatprep.subr.mxu0 0.0
  %803 = vmatpush1.msra.mxu0 0.0
  %804 = vmatprep.subr.mxu0 0.0
  %805 = vmatpush1.msra.mxu0 0.0
  %806 = vmatprep.subr.mxu0 0.0
  %807 = vmatpush1.msra.mxu0 0.0
  %808 = vmatprep.subr.mxu0 0.0
  %809 = vmatpush1.msra.mxu0 0.0
  %810 = vmatprep.subr.mxu0 0.0
  %811 = vmatpush1.msra.mxu0 0.0
  %812 = vmatprep.subr.mxu0 0.0
  %813 = vmatpush1.msra.mxu0 0.0
  %814 = vmatprep.subr.mxu0 0.0
  %815 = vmatpush1.msra.mxu0 0.0
  %816 = vmatprep.subr.mxu0 0.0
  %817 = vmatpush1.msra.mxu0 0.0
  %818 = vmatprep.subr.mxu0 0.0
  %819 = vmatpush1.msra.mxu0 0.0
  %820 = vmatprep.subr.mxu0 0.0
  %821 = vmatpush1.msra.mxu0 0.0
  %822 = vmatprep.subr.mxu0 0.0
  %823 = vmatpush1.msra.mxu0 0.0
  %824 = vmatprep.subr.mxu0 0.0
  %825 = vmatpush1.msra.mxu0 0.0
  %826 = vmatprep.subr.mxu0 0.0
  %827 = vmatpush1.msra.mxu0 0.0
  %828 = vmatprep.subr.mxu0 0.0
  %829 = vmatpush1.msra.mxu0 0.0
  %830 = vmatprep.subr.mxu0 0.0
  %831 = vmatpush1.msra.mxu0 0.0
  %832 = vmatprep.subr.mxu0 0.0
  %833 = vmatpush1.msra.mxu0 0.0
  %834 = vmatprep.subr.mxu0 0.0
  %835 = vmatpush1.msra.mxu0 0.0
  %836 = vmatprep.mubr.f32.mxu0 0.0
  %837 = vmatmul.mubr.f32.gmra.mrb[0].mxu0 %v770
  %v838 = vpop.f32.mrb[0].mxu0
  %v839 = vadd.f32 %v34, %v838
  %v840 = vpop.f32.mrb[0].mxu0
  %841 = vdwg.mxu0
  %v842 = vtanh.pop %v839
  %v843 = vxor.u32 %v839, 2147483648
  %v844 = vmul.f32 %v843, 1.442695
  %v845 = vpow.pop %v844
  %v846 = vadd.f32 %v845, 1.0
  %v847 = vrcp.pop %v846
  %v848 = vmul.f32 1.0, %v847
  %v849 = vsel %vm40, %v842, %v848
  %v850 = vmul.f32 %v849, %v653
  %852 = vrot.lane.b32.xlu0 %v849, 64
  %v853 = vpop.permute.xlu0 %852
  %v855 = vmul.f32 %v849, %v853
  %857 = vrot.lane.b32.xlu0 %v855, 32
  %v858 = vpop.permute.xlu0 %857
  %v860 = vadd.f32 %v850, %v858
  %v861 = vtanh.pop %v860
  %863 = vrot.lane.b32.xlu0 %v861, 64
  %v864 = vpop.permute.xlu0 %863
  %v866 = vmul.f32 %v849, %v864
  %s867 = scalar_lea.vmem %s0, 8
  %v868 = vld [vmem:[%s867] sm:$0x3]
  %v869 = vsel %vm42, %v762, 0
  %871 = vmatprep.subr.mxu0 0.0
  %872 = vmatpush1.msra.mxu0 %v17
  %873 = vmatprep.subr.mxu0 0.0
  %874 = vmatpush1.msra.mxu0 %v18
  %875 = vmatprep.subr.mxu0 0.0
  %876 = vmatpush1.msra.mxu0 %v19
  %877 = vmatprep.subr.mxu0 0.0
  %878 = vmatpush1.msra.mxu0 %v20
  %879 = vmatprep.subr.mxu0 0.0
  %880 = vmatpush1.msra.mxu0 0.0
  %881 = vmatprep.subr.mxu0 0.0
  %882 = vmatpush1.msra.mxu0 0.0
  %883 = vmatprep.subr.mxu0 0.0
  %884 = vmatpush1.msra.mxu0 0.0
  %885 = vmatprep.subr.mxu0 0.0
  %886 = vmatpush1.msra.mxu0 0.0
  %887 = vmatprep.subr.mxu0 0.0
  %888 = vmatpush1.msra.mxu0 0.0
  %889 = vmatprep.subr.mxu0 0.0
  %890 = vmatpush1.msra.mxu0 0.0
  %891 = vmatprep.subr.mxu0 0.0
  %892 = vmatpush1.msra.mxu0 0.0
  %893 = vmatprep.subr.mxu0 0.0
  %894 = vmatpush1.msra.mxu0 0.0
  %895 = vmatprep.subr.mxu0 0.0
  %896 = vmatpush1.msra.mxu0 0.0
  %897 = vmatprep.subr.mxu0 0.0
  %898 = vmatpush1.msra.mxu0 0.0
  %899 = vmatprep.subr.mxu0 0.0
  %900 = vmatpush1.msra.mxu0 0.0
  %901 = vmatprep.subr.mxu0 0.0
  %902 = vmatpush1.msra.mxu0 0.0
  %903 = vmatprep.subr.mxu0 0.0
  %904 = vmatpush1.msra.mxu0 0.0
  %905 = vmatprep.subr.mxu0 0.0
  %906 = vmatpush1.msra.mxu0 0.0
  %907 = vmatprep.subr.mxu0 0.0
  %908 = vmatpush1.msra.mxu0 0.0
  %909 = vmatprep.subr.mxu0 0.0
  %910 = vmatpush1.msra.mxu0 0.0
  %911 = vmatprep.subr.mxu0 0.0
  %912 = vmatpush1.msra.mxu0 0.0
  %913 = vmatprep.subr.mxu0 0.0
  %914 = vmatpush1.msra.mxu0 0.0
  %915 = vmatprep.subr.mxu0 0.0
  %916 = vmatpush1.msra.mxu0 0.0
  %917 = vmatprep.subr.mxu0 0.0
  %918 = vmatpush1.msra.mxu0 0.0
  %919 = vmatprep.subr.mxu0 0.0
  %920 = vmatpush1.msra.mxu0 0.0
  %921 = vmatprep.subr.mxu0 0.0
  %922 = vmatpush1.msra.mxu0 0.0
  %923 = vmatprep.subr.mxu0 0.0
  %924 = vmatpush1.msra.mxu0 0.0
  %925 = vmatprep.subr.mxu0 0.0
  %926 = vmatpush1.msra.mxu0 0.0
  %927 = vmatprep.subr.mxu0 0.0
  %928 = vmatpush1.msra.mxu0 0.0
  %929 = vmatprep.subr.mxu0 0.0
  %930 = vmatpush1.msra.mxu0 0.0
  %931 = vmatprep.subr.mxu0 0.0
  %932 = vmatpush1.msra.mxu0 0.0
  %933 = vmatprep.subr.mxu0 0.0
  %934 = vmatpush1.msra.mxu0 0.0
  %935 = vmatprep.mubr.f32.mxu0 0.0
  %936 = vmatmul.mubr.f32.gmra.mrb[0].mxu0 %v869
  %v937 = vpop.f32.mrb[0].mxu0
  %v938 = vadd.f32 0.0, %v937
  %v939 = vpop.f32.mrb[0].mxu0
  %940 = vdwg.mxu0
  %v941 = vadd.f32 %v868, %v938
  %v942 = vtanh.pop %v941
  %v943 = vxor.u32 %v941, 2147483648
  %v944 = vmul.f32 %v943, 1.442695
  %v945 = vpow.pop %v944
  %v946 = vadd.f32 %v945, 1.0
  %v947 = vrcp.pop %v946
  %v948 = vmul.f32 1.0, %v947
  %v949 = vsel %vm40, %v942, %v948
  %v950 = vmul.f32 %v949, %v753
  %952 = vrot.lane.b32.xlu0 %v949, 64
  %v953 = vpop.permute.xlu0 %952
  %v955 = vmul.f32 %v949, %v953
  %957 = vrot.lane.b32.xlu0 %v955, 32
  %v958 = vpop.permute.xlu0 %957
  %v960 = vadd.f32 %v950, %v958
  %v961 = vtanh.pop %v960
  %963 = vrot.lane.b32.xlu0 %v961, 64
  %v964 = vpop.permute.xlu0 %963
  %v966 = vmul.f32 %v949, %v964
  %968 = vrot.lane.b32.xlu0 %v966, 32
  %v969 = vpop.permute.xlu0 %968
  %972 = vrot.lane.b32.xlu0 %v866, 64
  %v973 = vpop.permute.xlu0 %972
  %v975 = vsel %vm42, %v969, %v973
  %v977 = vsel %vm147, %v975, 0
  %979 = vmatprep.subr.mxu0 0.0
  %980 = vmatpush1.msra.mxu0 %v21
  %981 = vmatprep.subr.mxu0 0.0
  %982 = vmatpush1.msra.mxu0 %v22
  %983 = vmatprep.subr.mxu0 0.0
  %984 = vmatpush1.msra.mxu0 %v23
  %985 = vmatprep.subr.mxu0 0.0
  %986 = vmatpush1.msra.mxu0 %v24
  %987 = vmatprep.subr.mxu0 0.0
  %988 = vmatpush1.msra.mxu0 %v25
  %989 = vmatprep.subr.mxu0 0.0
  %990 = vmatpush1.msra.mxu0 %v26
  %991 = vmatprep.subr.mxu0 0.0
  %992 = vmatpush1.msra.mxu0 %v27
  %993 = vmatprep.subr.mxu0 0.0
  %994 = vmatpush1.msra.mxu0 %v28
  %995 = vmatprep.subr.mxu0 0.0
  %996 = vmatpush1.msra.mxu0 0.0
  %997 = vmatprep.subr.mxu0 0.0
  %998 = vmatpush1.msra.mxu0 0.0
  %999 = vmatprep.subr.mxu0 0.0
  %1000 = vmatpush1.msra.mxu0 0.0
  %1001 = vmatprep.subr.mxu0 0.0
  %1002 = vmatpush1.msra.mxu0 0.0
  %1003 = vmatprep.subr.mxu0 0.0
  %1004 = vmatpush1.msra.mxu0 0.0
  %1005 = vmatprep.subr.mxu0 0.0
  %1006 = vmatpush1.msra.mxu0 0.0
  %1007 = vmatprep.subr.mxu0 0.0
  %1008 = vmatpush1.msra.mxu0 0.0
  %1009 = vmatprep.subr.mxu0 0.0
  %1010 = vmatpush1.msra.mxu0 0.0
  %1011 = vmatprep.subr.mxu0 0.0
  %1012 = vmatpush1.msra.mxu0 0.0
  %1013 = vmatprep.subr.mxu0 0.0
  %1014 = vmatpush1.msra.mxu0 0.0
  %1015 = vmatprep.subr.mxu0 0.0
  %1016 = vmatpush1.msra.mxu0 0.0
  %1017 = vmatprep.subr.mxu0 0.0
  %1018 = vmatpush1.msra.mxu0 0.0
  %1019 = vmatprep.subr.mxu0 0.0
  %1020 = vmatpush1.msra.mxu0 0.0
  %1021 = vmatprep.subr.mxu0 0.0
  %1022 = vmatpush1.msra.mxu0 0.0
  %1023 = vmatprep.subr.mxu0 0.0
  %1024 = vmatpush1.msra.mxu0 0.0
  %1025 = vmatprep.subr.mxu0 0.0
  %1026 = vmatpush1.msra.mxu0 0.0
  %1027 = vmatprep.subr.mxu0 0.0
  %1028 = vmatpush1.msra.mxu0 0.0
  %1029 = vmatprep.subr.mxu0 0.0
  %1030 = vmatpush1.msra.mxu0 0.0
  %1031 = vmatprep.subr.mxu0 0.0
  %1032 = vmatpush1.msra.mxu0 0.0
  %1033 = vmatprep.subr.mxu0 0.0
  %1034 = vmatpush1.msra.mxu0 0.0
  %1035 = vmatprep.subr.mxu0 0.0
  %1036 = vmatpush1.msra.mxu0 0.0
  %1037 = vmatprep.subr.mxu0 0.0
  %1038 = vmatpush1.msra.mxu0 0.0
  %1039 = vmatprep.subr.mxu0 0.0
  %1040 = vmatpush1.msra.mxu0 0.0
  %1041 = vmatprep.subr.mxu0 0.0
  %1042 = vmatpush1.msra.mxu0 0.0
  %1043 = vmatprep.mubr.f32.mxu0 0.0
  %1044 = vmatmul.mubr.f32.gmra.mrb[0].mxu0 %v977
  %v1045 = vpop.f32.mrb[0].mxu0
  %v1046 = vadd.f32 %v34, %v1045
  %v1047 = vpop.f32.mrb[0].mxu0
  %1048 = vdwg.mxu0
  %v1049 = vtanh.pop %v1046
  %v1050 = vxor.u32 %v1046, 2147483648
  %v1051 = vmul.f32 %v1050, 1.442695
  %v1052 = vpow.pop %v1051
  %v1053 = vadd.f32 %v1052, 1.0
  %v1054 = vrcp.pop %v1053
  %v1055 = vmul.f32 1.0, %v1054
  %v1056 = vsel %vm40, %v1049, %v1055
  %v1057 = vmul.f32 %v1056, %v860
  %1059 = vrot.lane.b32.xlu0 %v1056, 64
  %v1060 = vpop.permute.xlu0 %1059
  %v1062 = vmul.f32 %v1056, %v1060
  %1064 = vrot.lane.b32.xlu0 %v1062, 32
  %v1065 = vpop.permute.xlu0 %1064
  %v1067 = vadd.f32 %v1057, %v1065
  %v1068 = vtanh.pop %v1067
  %1070 = vrot.lane.b32.xlu0 %v1068, 64
  %v1071 = vpop.permute.xlu0 %1070
  %v1073 = vmul.f32 %v1056, %v1071
  %s1074 = scalar_lea.vmem %s0, 10
  %v1075 = vld [vmem:[%s1074] sm:$0x3]
  %v1076 = vsel %vm42, %v969, 0
  %1078 = vmatprep.subr.mxu0 0.0
  %1079 = vmatpush1.msra.mxu0 %v17
  %1080 = vmatprep.subr.mxu0 0.0
  %1081 = vmatpush1.msra.mxu0 %v18
  %1082 = vmatprep.subr.mxu0 0.0
  %1083 = vmatpush1.msra.mxu0 %v19
  %1084 = vmatprep.subr.mxu0 0.0
  %1085 = vmatpush1.msra.mxu0 %v20
  %1086 = vmatprep.subr.mxu0 0.0
  %1087 = vmatpush1.msra.mxu0 0.0
  %1088 = vmatprep.subr.mxu0 0.0
  %1089 = vmatpush1.msra.mxu0 0.0
  %1090 = vmatprep.subr.mxu0 0.0
  %1091 = vmatpush1.msra.mxu0 0.0
  %1092 = vmatprep.subr.mxu0 0.0
  %1093 = vmatpush1.msra.mxu0 0.0
  %1094 = vmatprep.subr.mxu0 0.0
  %1095 = vmatpush1.msra.mxu0 0.0
  %1096 = vmatprep.subr.mxu0 0.0
  %1097 = vmatpush1.msra.mxu0 0.0
  %1098 = vmatprep.subr.mxu0 0.0
  %1099 = vmatpush1.msra.mxu0 0.0
  %1100 = vmatprep.subr.mxu0 0.0
  %1101 = vmatpush1.msra.mxu0 0.0
  %1102 = vmatprep.subr.mxu0 0.0
  %1103 = vmatpush1.msra.mxu0 0.0
  %1104 = vmatprep.subr.mxu0 0.0
  %1105 = vmatpush1.msra.mxu0 0.0
  %1106 = vmatprep.subr.mxu0 0.0
  %1107 = vmatpush1.msra.mxu0 0.0
  %1108 = vmatprep.subr.mxu0 0.0
  %1109 = vmatpush1.msra.mxu0 0.0
  %1110 = vmatprep.subr.mxu0 0.0
  %1111 = vmatpush1.msra.mxu0 0.0
  %1112 = vmatprep.subr.mxu0 0.0
  %1113 = vmatpush1.msra.mxu0 0.0
  %1114 = vmatprep.subr.mxu0 0.0
  %1115 = vmatpush1.msra.mxu0 0.0
  %1116 = vmatprep.subr.mxu0 0.0
  %1117 = vmatpush1.msra.mxu0 0.0
  %1118 = vmatprep.subr.mxu0 0.0
  %1119 = vmatpush1.msra.mxu0 0.0
  %1120 = vmatprep.subr.mxu0 0.0
  %1121 = vmatpush1.msra.mxu0 0.0
  %1122 = vmatprep.subr.mxu0 0.0
  %1123 = vmatpush1.msra.mxu0 0.0
  %1124 = vmatprep.subr.mxu0 0.0
  %1125 = vmatpush1.msra.mxu0 0.0
  %1126 = vmatprep.subr.mxu0 0.0
  %1127 = vmatpush1.msra.mxu0 0.0
  %1128 = vmatprep.subr.mxu0 0.0
  %1129 = vmatpush1.msra.mxu0 0.0
  %1130 = vmatprep.subr.mxu0 0.0
  %1131 = vmatpush1.msra.mxu0 0.0
  %1132 = vmatprep.subr.mxu0 0.0
  %1133 = vmatpush1.msra.mxu0 0.0
  %1134 = vmatprep.subr.mxu0 0.0
  %1135 = vmatpush1.msra.mxu0 0.0
  %1136 = vmatprep.subr.mxu0 0.0
  %1137 = vmatpush1.msra.mxu0 0.0
  %1138 = vmatprep.subr.mxu0 0.0
  %1139 = vmatpush1.msra.mxu0 0.0
  %1140 = vmatprep.subr.mxu0 0.0
  %1141 = vmatpush1.msra.mxu0 0.0
  %1142 = vmatprep.mubr.f32.mxu0 0.0
  %1143 = vmatmul.mubr.f32.gmra.mrb[0].mxu0 %v1076
  %v1144 = vpop.f32.mrb[0].mxu0
  %v1145 = vadd.f32 0.0, %v1144
  %v1146 = vpop.f32.mrb[0].mxu0
  %1147 = vdwg.mxu0
  %v1148 = vadd.f32 %v1075, %v1145
  %v1149 = vtanh.pop %v1148
  %v1150 = vxor.u32 %v1148, 2147483648
  %v1151 = vmul.f32 %v1150, 1.442695
  %v1152 = vpow.pop %v1151
  %v1153 = vadd.f32 %v1152, 1.0
  %v1154 = vrcp.pop %v1153
  %v1155 = vmul.f32 1.0, %v1154
  %v1156 = vsel %vm40, %v1149, %v1155
  %v1157 = vmul.f32 %v1156, %v960
  %1159 = vrot.lane.b32.xlu0 %v1156, 64
  %v1160 = vpop.permute.xlu0 %1159
  %v1162 = vmul.f32 %v1156, %v1160
  %1164 = vrot.lane.b32.xlu0 %v1162, 32
  %v1165 = vpop.permute.xlu0 %1164
  %v1167 = vadd.f32 %v1157, %v1165
  %v1168 = vtanh.pop %v1167
  %1170 = vrot.lane.b32.xlu0 %v1168, 64
  %v1171 = vpop.permute.xlu0 %1170
  %v1173 = vmul.f32 %v1156, %v1171
  %1175 = vrot.lane.b32.xlu0 %v1173, 32
  %v1176 = vpop.permute.xlu0 %1175
  %1179 = vrot.lane.b32.xlu0 %v1073, 64
  %v1180 = vpop.permute.xlu0 %1179
  %v1182 = vsel %vm42, %v1176, %v1180
  %v1184 = vsel %vm147, %v1182, 0
  %1186 = vmatprep.subr.mxu0 0.0
  %1187 = vmatpush1.msra.mxu0 %v21
  %1188 = vmatprep.subr.mxu0 0.0
  %1189 = vmatpush1.msra.mxu0 %v22
  %1190 = vmatprep.subr.mxu0 0.0
  %1191 = vmatpush1.msra.mxu0 %v23
  %1192 = vmatprep.subr.mxu0 0.0
  %1193 = vmatpush1.msra.mxu0 %v24
  %1194 = vmatprep.subr.mxu0 0.0
  %1195 = vmatpush1.msra.mxu0 %v25
  %1196 = vmatprep.subr.mxu0 0.0
  %1197 = vmatpush1.msra.mxu0 %v26
  %1198 = vmatprep.subr.mxu0 0.0
  %1199 = vmatpush1.msra.mxu0 %v27
  %1200 = vmatprep.subr.mxu0 0.0
  %1201 = vmatpush1.msra.mxu0 %v28
  %1202 = vmatprep.subr.mxu0 0.0
  %1203 = vmatpush1.msra.mxu0 0.0
  %1204 = vmatprep.subr.mxu0 0.0
  %1205 = vmatpush1.msra.mxu0 0.0
  %1206 = vmatprep.subr.mxu0 0.0
  %1207 = vmatpush1.msra.mxu0 0.0
  %1208 = vmatprep.subr.mxu0 0.0
  %1209 = vmatpush1.msra.mxu0 0.0
  %1210 = vmatprep.subr.mxu0 0.0
  %1211 = vmatpush1.msra.mxu0 0.0
  %1212 = vmatprep.subr.mxu0 0.0
  %1213 = vmatpush1.msra.mxu0 0.0
  %1214 = vmatprep.subr.mxu0 0.0
  %1215 = vmatpush1.msra.mxu0 0.0
  %1216 = vmatprep.subr.mxu0 0.0
  %1217 = vmatpush1.msra.mxu0 0.0
  %1218 = vmatprep.subr.mxu0 0.0
  %1219 = vmatpush1.msra.mxu0 0.0
  %1220 = vmatprep.subr.mxu0 0.0
  %1221 = vmatpush1.msra.mxu0 0.0
  %1222 = vmatprep.subr.mxu0 0.0
  %1223 = vmatpush1.msra.mxu0 0.0
  %1224 = vmatprep.subr.mxu0 0.0
  %1225 = vmatpush1.msra.mxu0 0.0
  %1226 = vmatprep.subr.mxu0 0.0
  %1227 = vmatpush1.msra.mxu0 0.0
  %1228 = vmatprep.subr.mxu0 0.0
  %1229 = vmatpush1.msra.mxu0 0.0
  %1230 = vmatprep.subr.mxu0 0.0
  %1231 = vmatpush1.msra.mxu0 0.0
  %1232 = vmatprep.subr.mxu0 0.0
  %1233 = vmatpush1.msra.mxu0 0.0
  %1234 = vmatprep.subr.mxu0 0.0
  %1235 = vmatpush1.msra.mxu0 0.0
  %1236 = vmatprep.subr.mxu0 0.0
  %1237 = vmatpush1.msra.mxu0 0.0
  %1238 = vmatprep.subr.mxu0 0.0
  %1239 = vmatpush1.msra.mxu0 0.0
  %1240 = vmatprep.subr.mxu0 0.0
  %1241 = vmatpush1.msra.mxu0 0.0
  %1242 = vmatprep.subr.mxu0 0.0
  %1243 = vmatpush1.msra.mxu0 0.0
  %1244 = vmatprep.subr.mxu0 0.0
  %1245 = vmatpush1.msra.mxu0 0.0
  %1246 = vmatprep.subr.mxu0 0.0
  %1247 = vmatpush1.msra.mxu0 0.0
  %1248 = vmatprep.subr.mxu0 0.0
  %1249 = vmatpush1.msra.mxu0 0.0
  %1250 = vmatprep.mubr.f32.mxu0 0.0
  %1251 = vmatmul.mubr.f32.gmra.mrb[0].mxu0 %v1184
  %v1252 = vpop.f32.mrb[0].mxu0
  %v1253 = vadd.f32 %v34, %v1252
  %v1254 = vpop.f32.mrb[0].mxu0
  %1255 = vdwg.mxu0
  %v1256 = vtanh.pop %v1253
  %v1257 = vxor.u32 %v1253, 2147483648
  %v1258 = vmul.f32 %v1257, 1.442695
  %v1259 = vpow.pop %v1258
  %v1260 = vadd.f32 %v1259, 1.0
  %v1261 = vrcp.pop %v1260
  %v1262 = vmul.f32 1.0, %v1261
  %v1263 = vsel %vm40, %v1256, %v1262
  %v1264 = vmul.f32 %v1263, %v1067
  %1266 = vrot.lane.b32.xlu0 %v1263, 64
  %v1267 = vpop.permute.xlu0 %1266
  %v1269 = vmul.f32 %v1263, %v1267
  %1271 = vrot.lane.b32.xlu0 %v1269, 32
  %v1272 = vpop.permute.xlu0 %1271
  %v1274 = vadd.f32 %v1264, %v1272
  %v1275 = vtanh.pop %v1274
  %1277 = vrot.lane.b32.xlu0 %v1275, 64
  %v1278 = vpop.permute.xlu0 %1277
  %v1280 = vmul.f32 %v1263, %v1278
  %s1281 = scalar_lea.vmem %s0, 12
  %v1282 = vld [vmem:[%s1281] sm:$0x3]
  %v1283 = vsel %vm42, %v1176, 0
  %1285 = vmatprep.subr.mxu0 0.0
  %1286 = vmatpush1.msra.mxu0 %v17
  %1287 = vmatprep.subr.mxu0 0.0
  %1288 = vmatpush1.msra.mxu0 %v18
  %1289 = vmatprep.subr.mxu0 0.0
  %1290 = vmatpush1.msra.mxu0 %v19
  %1291 = vmatprep.subr.mxu0 0.0
  %1292 = vmatpush1.msra.mxu0 %v20
  %1293 = vmatprep.subr.mxu0 0.0
  %1294 = vmatpush1.msra.mxu0 0.0
  %1295 = vmatprep.subr.mxu0 0.0
  %1296 = vmatpush1.msra.mxu0 0.0
  %1297 = vmatprep.subr.mxu0 0.0
  %1298 = vmatpush1.msra.mxu0 0.0
  %1299 = vmatprep.subr.mxu0 0.0
  %1300 = vmatpush1.msra.mxu0 0.0
  %1301 = vmatprep.subr.mxu0 0.0
  %1302 = vmatpush1.msra.mxu0 0.0
  %1303 = vmatprep.subr.mxu0 0.0
  %1304 = vmatpush1.msra.mxu0 0.0
  %1305 = vmatprep.subr.mxu0 0.0
  %1306 = vmatpush1.msra.mxu0 0.0
  %1307 = vmatprep.subr.mxu0 0.0
  %1308 = vmatpush1.msra.mxu0 0.0
  %1309 = vmatprep.subr.mxu0 0.0
  %1310 = vmatpush1.msra.mxu0 0.0
  %1311 = vmatprep.subr.mxu0 0.0
  %1312 = vmatpush1.msra.mxu0 0.0
  %1313 = vmatprep.subr.mxu0 0.0
  %1314 = vmatpush1.msra.mxu0 0.0
  %1315 = vmatprep.subr.mxu0 0.0
  %1316 = vmatpush1.msra.mxu0 0.0
  %1317 = vmatprep.subr.mxu0 0.0
  %1318 = vmatpush1.msra.mxu0 0.0
  %1319 = vmatprep.subr.mxu0 0.0
  %1320 = vmatpush1.msra.mxu0 0.0
  %1321 = vmatprep.subr.mxu0 0.0
  %1322 = vmatpush1.msra.mxu0 0.0
  %1323 = vmatprep.subr.mxu0 0.0
  %1324 = vmatpush1.msra.mxu0 0.0
  %1325 = vmatprep.subr.mxu0 0.0
  %1326 = vmatpush1.msra.mxu0 0.0
  %1327 = vmatprep.subr.mxu0 0.0
  %1328 = vmatpush1.msra.mxu0 0.0
  %1329 = vmatprep.subr.mxu0 0.0
  %1330 = vmatpush1.msra.mxu0 0.0
  %1331 = vmatprep.subr.mxu0 0.0
  %1332 = vmatpush1.msra.mxu0 0.0
  %1333 = vmatprep.subr.mxu0 0.0
  %1334 = vmatpush1.msra.mxu0 0.0
  %1335 = vmatprep.subr.mxu0 0.0
  %1336 = vmatpush1.msra.mxu0 0.0
  %1337 = vmatprep.subr.mxu0 0.0
  %1338 = vmatpush1.msra.mxu0 0.0
  %1339 = vmatprep.subr.mxu0 0.0
  %1340 = vmatpush1.msra.mxu0 0.0
  %1341 = vmatprep.subr.mxu0 0.0
  %1342 = vmatpush1.msra.mxu0 0.0
  %1343 = vmatprep.subr.mxu0 0.0
  %1344 = vmatpush1.msra.mxu0 0.0
  %1345 = vmatprep.subr.mxu0 0.0
  %1346 = vmatpush1.msra.mxu0 0.0
  %1347 = vmatprep.subr.mxu0 0.0
  %1348 = vmatpush1.msra.mxu0 0.0
  %1349 = vmatprep.mubr.f32.mxu0 0.0
  %1350 = vmatmul.mubr.f32.gmra.mrb[0].mxu0 %v1283
  %v1351 = vpop.f32.mrb[0].mxu0
  %v1352 = vadd.f32 0.0, %v1351
  %v1353 = vpop.f32.mrb[0].mxu0
  %1354 = vdwg.mxu0
  %v1355 = vadd.f32 %v1282, %v1352
  %v1356 = vtanh.pop %v1355
  %v1357 = vxor.u32 %v1355, 2147483648
  %v1358 = vmul.f32 %v1357, 1.442695
  %v1359 = vpow.pop %v1358
  %v1360 = vadd.f32 %v1359, 1.0
  %v1361 = vrcp.pop %v1360
  %v1362 = vmul.f32 1.0, %v1361
  %v1363 = vsel %vm40, %v1356, %v1362
  %v1364 = vmul.f32 %v1363, %v1167
  %1366 = vrot.lane.b32.xlu0 %v1363, 64
  %v1367 = vpop.permute.xlu0 %1366
  %v1369 = vmul.f32 %v1363, %v1367
  %1371 = vrot.lane.b32.xlu0 %v1369, 32
  %v1372 = vpop.permute.xlu0 %1371
  %v1374 = vadd.f32 %v1364, %v1372
  %v1375 = vtanh.pop %v1374
  %1377 = vrot.lane.b32.xlu0 %v1375, 64
  %v1378 = vpop.permute.xlu0 %1377
  %v1380 = vmul.f32 %v1363, %v1378
  %1382 = vrot.lane.b32.xlu0 %v1380, 32
  %v1383 = vpop.permute.xlu0 %1382
  %1386 = vrot.lane.b32.xlu0 %v1280, 64
  %v1387 = vpop.permute.xlu0 %1386
  %v1389 = vsel %vm42, %v1383, %v1387
  %v1391 = vsel %vm147, %v1389, 0
  %1393 = vmatprep.subr.mxu0 0.0
  %1394 = vmatpush1.msra.mxu0 %v21
  %1395 = vmatprep.subr.mxu0 0.0
  %1396 = vmatpush1.msra.mxu0 %v22
  %1397 = vmatprep.subr.mxu0 0.0
  %1398 = vmatpush1.msra.mxu0 %v23
  %1399 = vmatprep.subr.mxu0 0.0
  %1400 = vmatpush1.msra.mxu0 %v24
  %1401 = vmatprep.subr.mxu0 0.0
  %1402 = vmatpush1.msra.mxu0 %v25
  %1403 = vmatprep.subr.mxu0 0.0
  %1404 = vmatpush1.msra.mxu0 %v26
  %1405 = vmatprep.subr.mxu0 0.0
  %1406 = vmatpush1.msra.mxu0 %v27
  %1407 = vmatprep.subr.mxu0 0.0
  %1408 = vmatpush1.msra.mxu0 %v28
  %1409 = vmatprep.subr.mxu0 0.0
  %1410 = vmatpush1.msra.mxu0 0.0
  %1411 = vmatprep.subr.mxu0 0.0
  %1412 = vmatpush1.msra.mxu0 0.0
  %1413 = vmatprep.subr.mxu0 0.0
  %1414 = vmatpush1.msra.mxu0 0.0
  %1415 = vmatprep.subr.mxu0 0.0
  %1416 = vmatpush1.msra.mxu0 0.0
  %1417 = vmatprep.subr.mxu0 0.0
  %1418 = vmatpush1.msra.mxu0 0.0
  %1419 = vmatprep.subr.mxu0 0.0
  %1420 = vmatpush1.msra.mxu0 0.0
  %1421 = vmatprep.subr.mxu0 0.0
  %1422 = vmatpush1.msra.mxu0 0.0
  %1423 = vmatprep.subr.mxu0 0.0
  %1424 = vmatpush1.msra.mxu0 0.0
  %1425 = vmatprep.subr.mxu0 0.0
  %1426 = vmatpush1.msra.mxu0 0.0
  %1427 = vmatprep.subr.mxu0 0.0
  %1428 = vmatpush1.msra.mxu0 0.0
  %1429 = vmatprep.subr.mxu0 0.0
  %1430 = vmatpush1.msra.mxu0 0.0
  %1431 = vmatprep.subr.mxu0 0.0
  %1432 = vmatpush1.msra.mxu0 0.0
  %1433 = vmatprep.subr.mxu0 0.0
  %1434 = vmatpush1.msra.mxu0 0.0
  %1435 = vmatprep.subr.mxu0 0.0
  %1436 = vmatpush1.msra.mxu0 0.0
  %1437 = vmatprep.subr.mxu0 0.0
  %1438 = vmatpush1.msra.mxu0 0.0
  %1439 = vmatprep.subr.mxu0 0.0
  %1440 = vmatpush1.msra.mxu0 0.0
  %1441 = vmatprep.subr.mxu0 0.0
  %1442 = vmatpush1.msra.mxu0 0.0
  %1443 = vmatprep.subr.mxu0 0.0
  %1444 = vmatpush1.msra.mxu0 0.0
  %1445 = vmatprep.subr.mxu0 0.0
  %1446 = vmatpush1.msra.mxu0 0.0
  %1447 = vmatprep.subr.mxu0 0.0
  %1448 = vmatpush1.msra.mxu0 0.0
  %1449 = vmatprep.subr.mxu0 0.0
  %1450 = vmatpush1.msra.mxu0 0.0
  %1451 = vmatprep.subr.mxu0 0.0
  %1452 = vmatpush1.msra.mxu0 0.0
  %1453 = vmatprep.subr.mxu0 0.0
  %1454 = vmatpush1.msra.mxu0 0.0
  %1455 = vmatprep.subr.mxu0 0.0
  %1456 = vmatpush1.msra.mxu0 0.0
  %1457 = vmatprep.mubr.f32.mxu0 0.0
  %1458 = vmatmul.mubr.f32.gmra.mrb[0].mxu0 %v1391
  %v1459 = vpop.f32.mrb[0].mxu0
  %v1460 = vadd.f32 %v34, %v1459
  %v1461 = vpop.f32.mrb[0].mxu0
  %1462 = vdwg.mxu0
  %v1463 = vtanh.pop %v1460
  %v1464 = vxor.u32 %v1460, 2147483648
  %v1465 = vmul.f32 %v1464, 1.442695
  %v1466 = vpow.pop %v1465
  %v1467 = vadd.f32 %v1466, 1.0
  %v1468 = vrcp.pop %v1467
  %v1469 = vmul.f32 1.0, %v1468
  %v1470 = vsel %vm40, %v1463, %v1469
  %v1471 = vmul.f32 %v1470, %v1274
  %1473 = vrot.lane.b32.xlu0 %v1470, 64
  %v1474 = vpop.permute.xlu0 %1473
  %v1476 = vmul.f32 %v1470, %v1474
  %1478 = vrot.lane.b32.xlu0 %v1476, 32
  %v1479 = vpop.permute.xlu0 %1478
  %v1481 = vadd.f32 %v1471, %v1479
  %v1482 = vtanh.pop %v1481
  %1484 = vrot.lane.b32.xlu0 %v1482, 64
  %v1485 = vpop.permute.xlu0 %1484
  %v1487 = vmul.f32 %v1470, %v1485
  %s1488 = scalar_lea.vmem %s0, 14
  %v1489 = vld [vmem:[%s1488] sm:$0x3]
  %v1490 = vsel %vm42, %v1383, 0
  %1492 = vmatprep.subr.mxu0 0.0
  %1493 = vmatpush1.msra.mxu0 %v17
  %1494 = vmatprep.subr.mxu0 0.0
  %1495 = vmatpush1.msra.mxu0 %v18
  %1496 = vmatprep.subr.mxu0 0.0
  %1497 = vmatpush1.msra.mxu0 %v19
  %1498 = vmatprep.subr.mxu0 0.0
  %1499 = vmatpush1.msra.mxu0 %v20
  %1500 = vmatprep.subr.mxu0 0.0
  %1501 = vmatpush1.msra.mxu0 0.0
  %1502 = vmatprep.subr.mxu0 0.0
  %1503 = vmatpush1.msra.mxu0 0.0
  %1504 = vmatprep.subr.mxu0 0.0
  %1505 = vmatpush1.msra.mxu0 0.0
  %1506 = vmatprep.subr.mxu0 0.0
  %1507 = vmatpush1.msra.mxu0 0.0
  %1508 = vmatprep.subr.mxu0 0.0
  %1509 = vmatpush1.msra.mxu0 0.0
  %1510 = vmatprep.subr.mxu0 0.0
  %1511 = vmatpush1.msra.mxu0 0.0
  %1512 = vmatprep.subr.mxu0 0.0
  %1513 = vmatpush1.msra.mxu0 0.0
  %1514 = vmatprep.subr.mxu0 0.0
  %1515 = vmatpush1.msra.mxu0 0.0
  %1516 = vmatprep.subr.mxu0 0.0
  %1517 = vmatpush1.msra.mxu0 0.0
  %1518 = vmatprep.subr.mxu0 0.0
  %1519 = vmatpush1.msra.mxu0 0.0
  %1520 = vmatprep.subr.mxu0 0.0
  %1521 = vmatpush1.msra.mxu0 0.0
  %1522 = vmatprep.subr.mxu0 0.0
  %1523 = vmatpush1.msra.mxu0 0.0
  %1524 = vmatprep.subr.mxu0 0.0
  %1525 = vmatpush1.msra.mxu0 0.0
  %1526 = vmatprep.subr.mxu0 0.0
  %1527 = vmatpush1.msra.mxu0 0.0
  %1528 = vmatprep.subr.mxu0 0.0
  %1529 = vmatpush1.msra.mxu0 0.0
  %1530 = vmatprep.subr.mxu0 0.0
  %1531 = vmatpush1.msra.mxu0 0.0
  %1532 = vmatprep.subr.mxu0 0.0
  %1533 = vmatpush1.msra.mxu0 0.0
  %1534 = vmatprep.subr.mxu0 0.0
  %1535 = vmatpush1.msra.mxu0 0.0
  %1536 = vmatprep.subr.mxu0 0.0
  %1537 = vmatpush1.msra.mxu0 0.0
  %1538 = vmatprep.subr.mxu0 0.0
  %1539 = vmatpush1.msra.mxu0 0.0
  %1540 = vmatprep.subr.mxu0 0.0
  %1541 = vmatpush1.msra.mxu0 0.0
  %1542 = vmatprep.subr.mxu0 0.0
  %1543 = vmatpush1.msra.mxu0 0.0
  %1544 = vmatprep.subr.mxu0 0.0
  %1545 = vmatpush1.msra.mxu0 0.0
  %1546 = vmatprep.subr.mxu0 0.0
  %1547 = vmatpush1.msra.mxu0 0.0
  %1548 = vmatprep.subr.mxu0 0.0
  %1549 = vmatpush1.msra.mxu0 0.0
  %1550 = vmatprep.subr.mxu0 0.0
  %1551 = vmatpush1.msra.mxu0 0.0
  %1552 = vmatprep.subr.mxu0 0.0
  %1553 = vmatpush1.msra.mxu0 0.0
  %1554 = vmatprep.subr.mxu0 0.0
  %1555 = vmatpush1.msra.mxu0 0.0
  %1556 = vmatprep.mubr.f32.mxu0 0.0
  %1557 = vmatmul.mubr.f32.gmra.mrb[0].mxu0 %v1490
  %v1558 = vpop.f32.mrb[0].mxu0
  %v1559 = vadd.f32 0.0, %v1558
  %v1560 = vpop.f32.mrb[0].mxu0
  %1561 = vdwg.mxu0
  %v1562 = vadd.f32 %v1489, %v1559
  %v1563 = vtanh.pop %v1562
  %v1564 = vxor.u32 %v1562, 2147483648
  %v1565 = vmul.f32 %v1564, 1.442695
  %v1566 = vpow.pop %v1565
  %v1567 = vadd.f32 %v1566, 1.0
  %v1568 = vrcp.pop %v1567
  %v1569 = vmul.f32 1.0, %v1568
  %v1570 = vsel %vm40, %v1563, %v1569
  %v1571 = vmul.f32 %v1570, %v1374
  %1573 = vrot.lane.b32.xlu0 %v1570, 64
  %v1574 = vpop.permute.xlu0 %1573
  %v1576 = vmul.f32 %v1570, %v1574
  %1578 = vrot.lane.b32.xlu0 %v1576, 32
  %v1579 = vpop.permute.xlu0 %1578
  %v1581 = vadd.f32 %v1571, %v1579
  %v1582 = vtanh.pop %v1581
  %1584 = vrot.lane.b32.xlu0 %v1582, 64
  %v1585 = vpop.permute.xlu0 %1584
  %v1587 = vmul.f32 %v1570, %v1585
  %1589 = vrot.lane.b32.xlu0 %v1587, 32
  %v1590 = vpop.permute.xlu0 %1589
  %1593 = vrot.lane.b32.xlu0 %v1487, 64
  %v1594 = vpop.permute.xlu0 %1593
  %v1596 = vsel %vm42, %v1590, %v1594
  %v1598 = vsel %vm147, %v1596, 0
  %1600 = vmatprep.subr.mxu0 0.0
  %1601 = vmatpush1.msra.mxu0 %v21
  %1602 = vmatprep.subr.mxu0 0.0
  %1603 = vmatpush1.msra.mxu0 %v22
  %1604 = vmatprep.subr.mxu0 0.0
  %1605 = vmatpush1.msra.mxu0 %v23
  %1606 = vmatprep.subr.mxu0 0.0
  %1607 = vmatpush1.msra.mxu0 %v24
  %1608 = vmatprep.subr.mxu0 0.0
  %1609 = vmatpush1.msra.mxu0 %v25
  %1610 = vmatprep.subr.mxu0 0.0
  %1611 = vmatpush1.msra.mxu0 %v26
  %1612 = vmatprep.subr.mxu0 0.0
  %1613 = vmatpush1.msra.mxu0 %v27
  %1614 = vmatprep.subr.mxu0 0.0
  %1615 = vmatpush1.msra.mxu0 %v28
  %1616 = vmatprep.subr.mxu0 0.0
  %1617 = vmatpush1.msra.mxu0 0.0
  %1618 = vmatprep.subr.mxu0 0.0
  %1619 = vmatpush1.msra.mxu0 0.0
  %1620 = vmatprep.subr.mxu0 0.0
  %1621 = vmatpush1.msra.mxu0 0.0
  %1622 = vmatprep.subr.mxu0 0.0
  %1623 = vmatpush1.msra.mxu0 0.0
  %1624 = vmatprep.subr.mxu0 0.0
  %1625 = vmatpush1.msra.mxu0 0.0
  %1626 = vmatprep.subr.mxu0 0.0
  %1627 = vmatpush1.msra.mxu0 0.0
  %1628 = vmatprep.subr.mxu0 0.0
  %1629 = vmatpush1.msra.mxu0 0.0
  %1630 = vmatprep.subr.mxu0 0.0
  %1631 = vmatpush1.msra.mxu0 0.0
  %1632 = vmatprep.subr.mxu0 0.0
  %1633 = vmatpush1.msra.mxu0 0.0
  %1634 = vmatprep.subr.mxu0 0.0
  %1635 = vmatpush1.msra.mxu0 0.0
  %1636 = vmatprep.subr.mxu0 0.0
  %1637 = vmatpush1.msra.mxu0 0.0
  %1638 = vmatprep.subr.mxu0 0.0
  %1639 = vmatpush1.msra.mxu0 0.0
  %1640 = vmatprep.subr.mxu0 0.0
  %1641 = vmatpush1.msra.mxu0 0.0
  %1642 = vmatprep.subr.mxu0 0.0
  %1643 = vmatpush1.msra.mxu0 0.0
  %1644 = vmatprep.subr.mxu0 0.0
  %1645 = vmatpush1.msra.mxu0 0.0
  %1646 = vmatprep.subr.mxu0 0.0
  %1647 = vmatpush1.msra.mxu0 0.0
  %1648 = vmatprep.subr.mxu0 0.0
  %1649 = vmatpush1.msra.mxu0 0.0
  %1650 = vmatprep.subr.mxu0 0.0
  %1651 = vmatpush1.msra.mxu0 0.0
  %1652 = vmatprep.subr.mxu0 0.0
  %1653 = vmatpush1.msra.mxu0 0.0
  %1654 = vmatprep.subr.mxu0 0.0
  %1655 = vmatpush1.msra.mxu0 0.0
  %1656 = vmatprep.subr.mxu0 0.0
  %1657 = vmatpush1.msra.mxu0 0.0
  %1658 = vmatprep.subr.mxu0 0.0
  %1659 = vmatpush1.msra.mxu0 0.0
  %1660 = vmatprep.subr.mxu0 0.0
  %1661 = vmatpush1.msra.mxu0 0.0
  %1662 = vmatprep.subr.mxu0 0.0
  %1663 = vmatpush1.msra.mxu0 0.0
  %1664 = vmatprep.mubr.f32.mxu0 0.0
  %1665 = vmatmul.mubr.f32.gmra.mrb[0].mxu0 %v1598
  %v1666 = vpop.f32.mrb[0].mxu0
  %v1667 = vadd.f32 %v34, %v1666
  %v1668 = vpop.f32.mrb[0].mxu0
  %1669 = vdwg.mxu0
  %v1670 = vtanh.pop %v1667
  %v1671 = vxor.u32 %v1667, 2147483648
  %v1672 = vmul.f32 %v1671, 1.442695
  %v1673 = vpow.pop %v1672
  %v1674 = vadd.f32 %v1673, 1.0
  %v1675 = vrcp.pop %v1674
  %v1676 = vmul.f32 1.0, %v1675
  %v1677 = vsel %vm40, %v1670, %v1676
  %v1678 = vmul.f32 %v1677, %v1481
  %1680 = vrot.lane.b32.xlu0 %v1677, 64
  %v1681 = vpop.permute.xlu0 %1680
  %v1683 = vmul.f32 %v1677, %v1681
  %1685 = vrot.lane.b32.xlu0 %v1683, 32
  %v1686 = vpop.permute.xlu0 %1685
  %v1688 = vadd.f32 %v1678, %v1686
  %v1689 = vtanh.pop %v1688
  %1691 = vrot.lane.b32.xlu0 %v1689, 64
  %v1692 = vpop.permute.xlu0 %1691
  %v1694 = vmul.f32 %v1677, %v1692
  %1696 = vrot.lane.b32.xlu0 %v1694, 32
  %v1697 = vpop.permute.xlu0 %1696
  %vm1699 = vcmask 254976
  %1700 = vst.msk [vmem:[%s4] sm:$0x3] %vm1699, %v1697
  // Predicated region
  $region18: #{lstm_forward.1} parent=0 // pred_check
    _
  $region19: #{lstm_forward.1} parent=0 // pred_check_branch
    %1702 = sbr.rel (0) target = $region21
  $region20: #{lstm_forward.1} parent=0 // pred_region
    _
  $region21: #{lstm_forward.1} parent=0 // pred_fallthru
    _
  // Predicated region
  $region22: #{lstm_forward.1} parent=0 // pred_check
    _
  $region23: #{lstm_forward.1} parent=0 // pred_check_branch
    %1704 = sbr.rel (0) target = $region25
  $region24: #{lstm_forward.1} parent=0 // pred_region
    _
  $region25: #{lstm_forward.1} parent=0 // pred_fallthru
    _

</llo_original>
